<compile_context>
chip_gen: v6e
topology: v6e:2x2x1
jax: 0.10.0
libtpu: 0.0.40
codegen_flags: <defaults>
</compile_context>

<pallas_src>
import jax
import jax.numpy as jnp
from jax import lax
from jax.experimental import pallas as pl
from jax.experimental.pallas import tpu as pltpu

LN_EPS = 1e-5


def valuenet_kernel(x_ref, w1_ref, b1_ref, w2_ref, b2_ref, w3_ref, b3_ref, o_ref):
    # --- LayerNorm statistics over the feature (lane) axis; affine folded into W1/b1 ---
    x = x_ref[...].astype(jnp.float32)
    mean = jnp.mean(x, axis=-1, keepdims=True)
    xc = x - mean
    var = jnp.mean(xc * xc, axis=-1, keepdims=True)
    xn = xc * lax.rsqrt(var + LN_EPS)

    # --- MLP hot path on the MXU (f32 accumulation) ---
    h1 = jnp.dot(xn, w1_ref[...], preferred_element_type=jnp.float32) + b1_ref[...]
    h1 = jnp.maximum(h1, 0.0)
    h2 = jnp.dot(h1, w2_ref[...], preferred_element_type=jnp.float32) + b2_ref[...]
    h2 = jnp.maximum(h2, 0.0)

    # --- Final 128 -> 1 projection, produced lane-dense ---
    # w3_ref is (8, 128) with the real weights in row 0 (rows 1..7 are zero padding so both
    # operands are (8,128)-tile aligned). Result row 0 is the (1, bm) output row.
    outs = jnp.dot(w3_ref[...], h2.T, preferred_element_type=jnp.float32)   # (8, bm)
    o_ref[...] = (outs[0:1, :] + b3_ref[0]).astype(o_ref.dtype)


def _round_up(n, m):
    return ((n + m - 1) // m) * m


def value_net_forward(x, params, *, bm=256):
    """x: [B, obs_dim] float32 -> [B, 1] float32 (ValueNet forward)."""
    g, be, w1, b1, w2, b2, w3, b3 = params
    B, obs_dim = x.shape
    H = w1.shape[1]

    # Fold the LayerNorm affine into the first Linear:
    #   (xn * g + be) @ W1 + b1 == xn @ (g[:, None] * W1) + (be @ W1 + b1)
    w1f = (w1 * g[:, None]).astype(jnp.float32)
    b1f = (b1 + be @ w1).reshape(1, H).astype(jnp.float32)
    b2r = b2.reshape(1, H).astype(jnp.float32)
    w3r = jnp.zeros((8, H), jnp.float32).at[0, :].set(w3.reshape(H))  # row 0 = w3, rows 1..7 = 0
    b3r = b3.reshape(1).astype(jnp.float32)                           # scalar -> SMEM

    # Batch tiling: large tiles amortize per-grid-step overhead and fill MXU rows.
    bm = min(bm, _round_up(B, 8))
    b_pad = _round_up(B, bm)
    if b_pad != B:
        x = jnp.pad(x, ((0, b_pad - B), (0, 0)))
    grid = (b_pad // bm,)

    full = lambda i: (0, 0)
    cost = pl.CostEstimate(
        flops=int(2 * b_pad * (obs_dim * H + H * H + 8 * H) + 8 * b_pad * obs_dim),
        transcendentals=int(b_pad),
        bytes_accessed=int(4 * (b_pad * obs_dim + obs_dim * H + H * H + 10 * H + 1 + b_pad)),
    )

    out = pl.pallas_call(
        valuenet_kernel,
        out_shape=jax.ShapeDtypeStruct((1, b_pad), jnp.float32),
        grid_spec=pltpu.PrefetchScalarGridSpec(
            num_scalar_prefetch=0,
            grid=grid,
            in_specs=[
                pl.BlockSpec((bm, obs_dim), lambda i: (i, 0)),        # x tile
                pl.BlockSpec((obs_dim, H), full),                     # W1 (LN affine folded)
                pl.BlockSpec((1, H), full),                           # b1 (LN affine folded)
                pl.BlockSpec((H, H), full),                           # W2
                pl.BlockSpec((1, H), full),                           # b2
                pl.BlockSpec((8, H), full),                           # W3 (row 0) padded to 8 rows
                pl.BlockSpec(memory_space=pltpu.MemorySpace.SMEM),    # b3 scalar
            ],
            out_specs=pl.BlockSpec((1, bm), lambda i: (0, i)),        # lane-dense output row
        ),
        compiler_params=pltpu.CompilerParams(
            dimension_semantics=("parallel",)),
        cost_estimate=cost,
    )(x, w1f, b1f, w2, b2r, w3r, b3r)

    return out.reshape(b_pad, 1)[:B]


def init_params(key, obs_dim, hidden=128):
    """Deterministic synthetic parameters (PyTorch-like uniform fan-in init)."""
    ks = jax.random.split(key, 8)

    def lin(kw, kb, fan_in, fan_out):
        bound = 1.0 / jnp.sqrt(fan_in)
        w = jax.random.uniform(kw, (fan_in, fan_out), jnp.float32, -bound, bound)
        b = jax.random.uniform(kb, (fan_out,), jnp.float32, -bound, bound)
        return w, b

    # Non-trivial LayerNorm affine so the gamma/beta folding is actually exercised.
    g = 1.0 + 0.1 * jax.random.normal(ks[0], (obs_dim,), jnp.float32)
    be = 0.1 * jax.random.normal(ks[1], (obs_dim,), jnp.float32)
    w1, b1 = lin(ks[2], ks[3], obs_dim, hidden)
    w2, b2 = lin(ks[4], ks[5], hidden, hidden)
    w3, b3 = lin(ks[6], ks[7], hidden, 1)
    return (g, be, w1, b1, w2, b2, w3, b3)


def value_net_reference(x, params):
    g, be, w1, b1, w2, b2, w3, b3 = params
    mean = jnp.mean(x, axis=-1, keepdims=True)
    var = jnp.mean((x - mean) ** 2, axis=-1, keepdims=True)
    xn = (x - mean) * lax.rsqrt(var + LN_EPS) * g + be
    h1 = jnp.maximum(xn @ w1 + b1, 0.0)
    h2 = jnp.maximum(h1 @ w2 + b2, 0.0)
    return h2 @ w3 + b3


if __name__ == "__main__":
    key = jax.random.PRNGKey(0)
    k_x, k_p = jax.random.split(key)

    # Ragged batch (not a multiple of the tile) exercises the padding path: 2 tiles of 256.
    B, obs_dim = 300, 32
    x = jax.random.normal(k_x, (B, obs_dim), jnp.float32)
    params = init_params(k_p, obs_dim)

    out = jax.block_until_ready(value_net_forward(x, params))
    ref = jax.block_until_ready(value_net_reference(x, params))

    assert out.shape == (B, 1)
    assert jnp.allclose(out, ref, rtol=1e-4, atol=1e-4), "mismatch vs JAX reference"

    print("KERNEL_OK")
</pallas_src>

<mosaic_0001>
module attributes {stable_mosaic.version = 11 : i64} {
  func.func @valuenet_kernel(%arg0: i32, %arg1: memref<256x32xf32, #tpu.memory_space<vmem>>, %arg2: memref<32x128xf32, #tpu.memory_space<vmem>>, %arg3: memref<1x128xf32, #tpu.memory_space<vmem>>, %arg4: memref<128x128xf32, #tpu.memory_space<vmem>>, %arg5: memref<1x128xf32, #tpu.memory_space<vmem>>, %arg6: memref<8x128xf32, #tpu.memory_space<vmem>>, %arg7: memref<1xf32, #tpu.memory_space<smem>>, %arg8: memref<1x256xf32, #tpu.memory_space<vmem>>) attributes {dimension_semantics = [#tpu.dimension_semantics<parallel>], iteration_bounds = array<i64: 2>, scalar_prefetch = 0 : i64, scratch_operands = 0 : i64, tpu.core_type = #tpu.core_type<tc>, window_params = [{transform_indices = @transform_0, window_bounds = array<i64: 256, 32>}, {pipeline_mode = #tpu.pipeline_mode<synchronous>, transform_indices = @transform_1, window_bounds = array<i64: 32, 128>}, {pipeline_mode = #tpu.pipeline_mode<synchronous>, transform_indices = @transform_2, window_bounds = array<i64: 1, 128>}, {pipeline_mode = #tpu.pipeline_mode<synchronous>, transform_indices = @transform_3, window_bounds = array<i64: 128, 128>}, {pipeline_mode = #tpu.pipeline_mode<synchronous>, transform_indices = @transform_4, window_bounds = array<i64: 1, 128>}, {pipeline_mode = #tpu.pipeline_mode<synchronous>, transform_indices = @transform_5, window_bounds = array<i64: 8, 128>}, {transform_indices = @transform_6, window_bounds = array<i64: 1>}, {transform_indices = @transform_7, window_bounds = array<i64: 1, 256>}]} {
    %c0 = arith.constant 0 : index
    %c0_0 = arith.constant 0 : index
    %0 = vector.load %arg1[%c0, %c0_0] : memref<256x32xf32, #tpu.memory_space<vmem>>, vector<256x32xf32>
    %cst = arith.constant dense<0.000000e+00> : vector<256xf32>
    %1 = vector.multi_reduction <add>, %0, %cst [1] : vector<256x32xf32> to vector<256xf32>
    %2 = vector.shape_cast %1 : vector<256xf32> to vector<256x1xf32>
    %cst_1 = arith.constant 3.200000e+01 : f32
    %3 = vector.broadcast %cst_1 : f32 to vector<256x1xf32>
    %4 = arith.divf %2, %3 : vector<256x1xf32>
    %5 = vector.broadcast %4 : vector<256x1xf32> to vector<256x32xf32>
    %6 = arith.subf %0, %5 : vector<256x32xf32>
    %7 = arith.mulf %6, %6 : vector<256x32xf32>
    %cst_2 = arith.constant dense<0.000000e+00> : vector<256xf32>
    %8 = vector.multi_reduction <add>, %7, %cst_2 [1] : vector<256x32xf32> to vector<256xf32>
    %9 = vector.shape_cast %8 : vector<256xf32> to vector<256x1xf32>
    %cst_3 = arith.constant 3.200000e+01 : f32
    %10 = vector.broadcast %cst_3 : f32 to vector<256x1xf32>
    %11 = arith.divf %9, %10 : vector<256x1xf32>
    %cst_4 = arith.constant 9.99999974E-6 : f32
    %12 = vector.broadcast %cst_4 : f32 to vector<256x1xf32>
    %13 = arith.addf %11, %12 : vector<256x1xf32>
    %14 = math.rsqrt %13 : vector<256x1xf32>
    %15 = vector.broadcast %14 : vector<256x1xf32> to vector<256x32xf32>
    %16 = arith.mulf %6, %15 : vector<256x32xf32>
    %c0_5 = arith.constant 0 : index
    %c0_6 = arith.constant 0 : index
    %17 = vector.load %arg2[%c0_5, %c0_6] : memref<32x128xf32, #tpu.memory_space<vmem>>, vector<32x128xf32>
    %cst_7 = arith.constant dense<0.000000e+00> : vector<256x128xf32>
    %18 = tpu.matmul %16, %17, %cst_7 {dimension_numbers = #tpu.dot_dimension_numbers<[1], [0], [0], [1], [0, 0, 1, 1], [], []>} : vector<256x32xf32>, vector<32x128xf32>, vector<256x128xf32> -> vector<256x128xf32>
    %c0_8 = arith.constant 0 : index
    %c0_9 = arith.constant 0 : index
    %19 = vector.load %arg3[%c0_8, %c0_9] : memref<1x128xf32, #tpu.memory_space<vmem>>, vector<1x128xf32>
    %20 = vector.broadcast %19 : vector<1x128xf32> to vector<256x128xf32>
    %21 = arith.addf %18, %20 : vector<256x128xf32>
    %cst_10 = arith.constant 0.000000e+00 : f32
    %22 = vector.broadcast %cst_10 : f32 to vector<256x128xf32>
    %23 = arith.maximumf %21, %22 : vector<256x128xf32>
    %c0_11 = arith.constant 0 : index
    %c0_12 = arith.constant 0 : index
    %24 = vector.load %arg4[%c0_11, %c0_12] : memref<128x128xf32, #tpu.memory_space<vmem>>, vector<128x128xf32>
    %cst_13 = arith.constant dense<0.000000e+00> : vector<256x128xf32>
    %25 = tpu.matmul %23, %24, %cst_13 {dimension_numbers = #tpu.dot_dimension_numbers<[1], [0], [0], [1], [0, 0, 1, 1], [], []>} : vector<256x128xf32>, vector<128x128xf32>, vector<256x128xf32> -> vector<256x128xf32>
    %c0_14 = arith.constant 0 : index
    %c0_15 = arith.constant 0 : index
    %26 = vector.load %arg5[%c0_14, %c0_15] : memref<1x128xf32, #tpu.memory_space<vmem>>, vector<1x128xf32>
    %27 = vector.broadcast %26 : vector<1x128xf32> to vector<256x128xf32>
    %28 = arith.addf %25, %27 : vector<256x128xf32>
    %cst_16 = arith.constant 0.000000e+00 : f32
    %29 = vector.broadcast %cst_16 : f32 to vector<256x128xf32>
    %30 = arith.maximumf %28, %29 : vector<256x128xf32>
    %c0_17 = arith.constant 0 : index
    %c0_18 = arith.constant 0 : index
    %31 = vector.load %arg6[%c0_17, %c0_18] : memref<8x128xf32, #tpu.memory_space<vmem>>, vector<8x128xf32>
    %32 = tpu.transpose %30, [1, 0] : vector<256x128xf32> -> vector<128x256xf32>
    %cst_19 = arith.constant dense<0.000000e+00> : vector<8x256xf32>
    %33 = tpu.matmul %31, %32, %cst_19 {dimension_numbers = #tpu.dot_dimension_numbers<[1], [0], [0], [1], [0, 0, 1, 1], [], []>} : vector<8x128xf32>, vector<128x256xf32>, vector<8x256xf32> -> vector<8x256xf32>
    %34 = vector.extract_strided_slice %33 {offsets = [0, 0], sizes = [1, 256], strides = [1, 1]} : vector<8x256xf32> to vector<1x256xf32>
    %c0_20 = arith.constant 0 : index
    %35 = memref.load %arg7[%c0_20] : memref<1xf32, #tpu.memory_space<smem>>
    %36 = vector.broadcast %35 : f32 to vector<1x256xf32>
    %37 = arith.addf %34, %36 : vector<1x256xf32>
    %c0_21 = arith.constant 0 : index
    %c0_22 = arith.constant 0 : index
    %38 = vector.load %arg8[%c0_21, %c0_22] : memref<1x256xf32, #tpu.memory_space<vmem>>, vector<1x256xf32>
    tpu.vector_store %arg8[%c0_21, %c0_22], %37 {strides = array<i32>} : memref<1x256xf32, #tpu.memory_space<vmem>>, vector<1x256xf32>,
    return
  }
  func.func @transform_0(%arg0: i32) -> (i32, i32) {
    %c0_i32 = arith.constant 0 : i32
    %c0_i32_0 = arith.constant 0 : i32
    return %arg0, %c0_i32 : i32, i32
  }
  func.func @transform_1(%arg0: i32) -> (i32, i32) {
    %c0_i32 = arith.constant 0 : i32
    %c0_i32_0 = arith.constant 0 : i32
    %c0_i32_1 = arith.constant 0 : i32
    return %c0_i32, %c0_i32_0 : i32, i32
  }
  func.func @transform_2(%arg0: i32) -> (i32, i32) {
    %c0_i32 = arith.constant 0 : i32
    %c0_i32_0 = arith.constant 0 : i32
    %c0_i32_1 = arith.constant 0 : i32
    return %c0_i32, %c0_i32_0 : i32, i32
  }
  func.func @transform_3(%arg0: i32) -> (i32, i32) {
    %c0_i32 = arith.constant 0 : i32
    %c0_i32_0 = arith.constant 0 : i32
    %c0_i32_1 = arith.constant 0 : i32
    return %c0_i32, %c0_i32_0 : i32, i32
  }
  func.func @transform_4(%arg0: i32) -> (i32, i32) {
    %c0_i32 = arith.constant 0 : i32
    %c0_i32_0 = arith.constant 0 : i32
    %c0_i32_1 = arith.constant 0 : i32
    return %c0_i32, %c0_i32_0 : i32, i32
  }
  func.func @transform_5(%arg0: i32) -> (i32, i32) {
    %c0_i32 = arith.constant 0 : i32
    %c0_i32_0 = arith.constant 0 : i32
    %c0_i32_1 = arith.constant 0 : i32
    return %c0_i32, %c0_i32_0 : i32, i32
  }
  func.func @transform_6(%arg0: i32) -> i32 {
    %c0_i32 = arith.constant 0 : i32
    %c0_i32_0 = arith.constant 0 : i32
    return %c0_i32 : i32
  }
  func.func @transform_7(%arg0: i32) -> (i32, i32) {
    %c0_i32 = arith.constant 0 : i32
    %c0_i32_0 = arith.constant 0 : i32
    return %c0_i32, %arg0 : i32, i32
  }
}

</mosaic_0001>

<llo_original>
// kernel: tpu_custom_call.1
$region0: #{tpu_custom_call.1}
  #allocation0 [shape = 'u32[]', space=smem, size = 0x4, offset = 0x4, fixed_abs, tag = 'smem constant byte address 0x4 - core index']
  #allocation1 [shape = 'u32[144,128]{1,0:T(1,128)}', space=vmem, size = 0x12000, scoped, tag = 'internal scratch']
  #allocation2 [shape = 'f32[1]{0:T(128)S(6)}', space=smem, size = 0x200, scoped, tag = 'scoped memory for tpu_custom_call.1']
  %s0 = inlined_call_operand.vmem [shape: f32[512,32], index: 0, kind: input, shape index: {}]
  %s1 = inlined_call_operand.vmem [shape: f32[32,128], index: 1, kind: input, shape index: {}]
  %s2 = inlined_call_operand.vmem [shape: f32[1,128], index: 2, kind: input, shape index: {}]
  %s3 = inlined_call_operand.vmem [shape: f32[128,128], index: 3, kind: input, shape index: {}]
  %s4 = inlined_call_operand.vmem [shape: f32[1,128], index: 4, kind: input, shape index: {}]
  %s5 = inlined_call_operand.vmem [shape: f32[8,128], index: 5, kind: input, shape index: {}]
  %s6 = inlined_call_operand.<no memory space> [shape: f32[1], index: 6, kind: input, shape index: {}]
  %s7 = inlined_call_operand.hbm [shape: f32[1,512], index: 7, kind: output, shape index: {}]
  %s8 = sld [smem:[#allocation0]]
  $region61: #{tpu_custom_call.1} parent=0
    _
  %s10 = ssub.s32 1, %s8
  %s11 = scalar_select 0, %s10, %s8
  %12 = sst [smem:[#allocation2]] %s6
  $region1: #{tpu_custom_call.1} parent=0
    #allocation3 [shape = 'u8[2048]{0}', space=vmem, size = 0x800, scoped, tag = 'output window, operand 0']
    #allocation4 [shape = 's32[2]{0}', space=sflag, size = 0x8, scoped, tag = 'scoped memory for tpu_custom_call.1']
    %13 = vsyncpa [#allocation4], 0
    %s14 = scalar_lea.sflag [#allocation4], 1
    %15 = vsyncpa %s14, 0
    loop: start=0, step=1, limit=4
    $region2: #{tpu_custom_call.1} parent=1 // loop_pre_header
      _
    $region3: #{tpu_custom_call.1} parent=1 // loop_header
      %s17 = sphi 0, %s21
      %p18 = scmp.ge.s32.totalorder %s17, 4
      %s27 = sphi 0, %s29
      %s30 = sphi 0, %s27
      %s31 = sphi 0, %s30
      %s47 = sphi 0, %s31
      %s51 = sphi 0, %s51
      %s53 = sphi 0, %s51
      %s54 = sphi 0, %s53
      %s68 = sphi 0, %s54
      %s72 = sphi 0, %s72
      %s74 = sphi 0, %s72
      %s75 = sphi 0, %s74
      %s89 = sphi 0, %s75
      %s93 = sphi 0, %s93
      %s95 = sphi 0, %s93
      %s96 = sphi 0, %s95
      %s110 = sphi 0, %s96
      %s114 = sphi 0, %s114
      %s116 = sphi 0, %s114
      %s117 = sphi 0, %s116
      %s131 = sphi 0, %s117
      %s135 = sphi 0, %s135
      %s137 = sphi 0, %s135
      %s138 = sphi 0, %s137
      %s152 = sphi 0, %s138
      %s156 = sphi 0, %s156
      %s158 = sphi 0, %s156
      %s159 = sphi 0, %s158
      %s173 = sphi 0, %s159
      %s179 = sphi 0, %s181
      %s182 = sphi 0, %s179
      %s183 = sphi 0, %s182
      %s199 = sphi 0, %s183
    $region4: #{tpu_custom_call.1} parent=1 // loop_header_branch
      %20 = sbr.rel (%p18) target = $region8
    $region5: #{tpu_custom_call.1} parent=1 // loop_body
      %s22 = ssub.s32 %s17, 1
      %s23 = ssub.s32 %s17, 2
      %s24 = sadd.s32 %s17, 1
      %s25 = ssub.s32 %s17, %s24
      %p26 = scmp.eq.s32.totalorder %s25, 0
      %s28 = sadd.s32 %s27, 1
      %s29 = scalar_select %p26, %s27, %s28
      %p32 = pneg %p26
      %p33 = scmp.eq.s32.totalorder %s17, 1
      %p34 = por %p32, %p33
      %p35 = scmp.ne.s32.totalorder %s27, %s30
      %p36 = scmp.eq.s32.totalorder %s17, 0
      %p37 = por %p35, %p36
      %p38 = scmp.ne.s32.totalorder %s27, %s30
      %p39 = scmp.eq.s32.totalorder %s22, 1
      %p40 = por %p38, %p39
      %p41 = scmp.ne.s32.totalorder %s30, %s31
      %p42 = scmp.eq.s32.totalorder %s22, 0
      %p43 = por %p41, %p42
      %p44 = scmp.ne.s32.totalorder %s30, %s31
      %p45 = scmp.eq.s32.totalorder %s23, 1
      %p46 = por %p44, %p45
      %p48 = scmp.ne.s32.totalorder %s31, %s47
      %p49 = scmp.eq.s32.totalorder %s23, 0
      %p50 = por %p48, %p49
      %s52 = sadd.s32 %s51, 1
      %p55 = scmp.eq.s32.totalorder %s17, 1
      %p56 = scmp.ne.s32.totalorder %s51, %s53
      %p57 = scmp.eq.s32.totalorder %s17, 0
      %p58 = por %p56, %p57
      %p59 = scmp.ne.s32.totalorder %s51, %s53
      %p60 = scmp.eq.s32.totalorder %s22, 1
      %p61 = por %p59, %p60
      %p62 = scmp.ne.s32.totalorder %s53, %s54
      %p63 = scmp.eq.s32.totalorder %s22, 0
      %p64 = por %p62, %p63
      %p65 = scmp.ne.s32.totalorder %s53, %s54
      %p66 = scmp.eq.s32.totalorder %s23, 1
      %p67 = por %p65, %p66
      %p69 = scmp.ne.s32.totalorder %s54, %s68
      %p70 = scmp.eq.s32.totalorder %s23, 0
      %p71 = por %p69, %p70
      %s73 = sadd.s32 %s72, 1
      %p76 = scmp.eq.s32.totalorder %s17, 1
      %p77 = scmp.ne.s32.totalorder %s72, %s74
      %p78 = scmp.eq.s32.totalorder %s17, 0
      %p79 = por %p77, %p78
      %p80 = scmp.ne.s32.totalorder %s72, %s74
      %p81 = scmp.eq.s32.totalorder %s22, 1
      %p82 = por %p80, %p81
      %p83 = scmp.ne.s32.totalorder %s74, %s75
      %p84 = scmp.eq.s32.totalorder %s22, 0
      %p85 = por %p83, %p84
      %p86 = scmp.ne.s32.totalorder %s74, %s75
      %p87 = scmp.eq.s32.totalorder %s23, 1
      %p88 = por %p86, %p87
      %p90 = scmp.ne.s32.totalorder %s75, %s89
      %p91 = scmp.eq.s32.totalorder %s23, 0
      %p92 = por %p90, %p91
      %s94 = sadd.s32 %s93, 1
      %p97 = scmp.eq.s32.totalorder %s17, 1
      %p98 = scmp.ne.s32.totalorder %s93, %s95
      %p99 = scmp.eq.s32.totalorder %s17, 0
      %p100 = por %p98, %p99
      %p101 = scmp.ne.s32.totalorder %s93, %s95
      %p102 = scmp.eq.s32.totalorder %s22, 1
      %p103 = por %p101, %p102
      %p104 = scmp.ne.s32.totalorder %s95, %s96
      %p105 = scmp.eq.s32.totalorder %s22, 0
      %p106 = por %p104, %p105
      %p107 = scmp.ne.s32.totalorder %s95, %s96
      %p108 = scmp.eq.s32.totalorder %s23, 1
      %p109 = por %p107, %p108
      %p111 = scmp.ne.s32.totalorder %s96, %s110
      %p112 = scmp.eq.s32.totalorder %s23, 0
      %p113 = por %p111, %p112
      %s115 = sadd.s32 %s114, 1
      %p118 = scmp.eq.s32.totalorder %s17, 1
      %p119 = scmp.ne.s32.totalorder %s114, %s116
      %p120 = scmp.eq.s32.totalorder %s17, 0
      %p121 = por %p119, %p120
      %p122 = scmp.ne.s32.totalorder %s114, %s116
      %p123 = scmp.eq.s32.totalorder %s22, 1
      %p124 = por %p122, %p123
      %p125 = scmp.ne.s32.totalorder %s116, %s117
      %p126 = scmp.eq.s32.totalorder %s22, 0
      %p127 = por %p125, %p126
      %p128 = scmp.ne.s32.totalorder %s116, %s117
      %p129 = scmp.eq.s32.totalorder %s23, 1
      %p130 = por %p128, %p129
      %p132 = scmp.ne.s32.totalorder %s117, %s131
      %p133 = scmp.eq.s32.totalorder %s23, 0
      %p134 = por %p132, %p133
      %s136 = sadd.s32 %s135, 1
      %p139 = scmp.eq.s32.totalorder %s17, 1
      %p140 = scmp.ne.s32.totalorder %s135, %s137
      %p141 = scmp.eq.s32.totalorder %s17, 0
      %p142 = por %p140, %p141
      %p143 = scmp.ne.s32.totalorder %s135, %s137
      %p144 = scmp.eq.s32.totalorder %s22, 1
      %p145 = por %p143, %p144
      %p146 = scmp.ne.s32.totalorder %s137, %s138
      %p147 = scmp.eq.s32.totalorder %s22, 0
      %p148 = por %p146, %p147
      %p149 = scmp.ne.s32.totalorder %s137, %s138
      %p150 = scmp.eq.s32.totalorder %s23, 1
      %p151 = por %p149, %p150
      %p153 = scmp.ne.s32.totalorder %s138, %s152
      %p154 = scmp.eq.s32.totalorder %s23, 0
      %p155 = por %p153, %p154
      %s157 = sadd.s32 %s156, 1
      %p160 = scmp.eq.s32.totalorder %s17, 1
      %p161 = scmp.ne.s32.totalorder %s156, %s158
      %p162 = scmp.eq.s32.totalorder %s17, 0
      %p163 = por %p161, %p162
      %p164 = scmp.ne.s32.totalorder %s156, %s158
      %p165 = scmp.eq.s32.totalorder %s22, 1
      %p166 = por %p164, %p165
      %p167 = scmp.ne.s32.totalorder %s158, %s159
      %p168 = scmp.eq.s32.totalorder %s22, 0
      %p169 = por %p167, %p168
      %p170 = scmp.ne.s32.totalorder %s158, %s159
      %p171 = scmp.eq.s32.totalorder %s23, 1
      %p172 = por %p170, %p171
      %p174 = scmp.ne.s32.totalorder %s159, %s173
      %p175 = scmp.eq.s32.totalorder %s23, 0
      %p176 = por %p174, %p175
      %s177 = ssub.s32 %s17, %s24
      %p178 = scmp.eq.s32.totalorder %s177, 0
      %s180 = sadd.s32 %s179, 1
      %s181 = scalar_select %p178, %s179, %s180
      %p184 = pneg %p178
      %p185 = scmp.eq.s32.totalorder %s17, 1
      %p186 = por %p184, %p185
      %p187 = scmp.ne.s32.totalorder %s179, %s182
      %p188 = scmp.eq.s32.totalorder %s17, 0
      %p189 = por %p187, %p188
      %p190 = scmp.ne.s32.totalorder %s179, %s182
      %p191 = scmp.eq.s32.totalorder %s22, 1
      %p192 = por %p190, %p191
      %p193 = scmp.ne.s32.totalorder %s182, %s183
      %p194 = scmp.eq.s32.totalorder %s22, 0
      %p195 = por %p193, %p194
      %p196 = scmp.ne.s32.totalorder %s182, %s183
      %p197 = scmp.eq.s32.totalorder %s23, 1
      %p198 = por %p196, %p197
      %p200 = scmp.ne.s32.totalorder %s183, %s199
      %p201 = scmp.eq.s32.totalorder %s23, 0
      %p202 = por %p200, %p201
      %p203 = scmp.le.s32.totalorder 1, %s17
      %p204 = scmp.lt.s32.totalorder %s17, 3
      %p205 = pnand %p203, %p204
      %p206 = pneg %p205
      // Predicated region
      $region9: #{tpu_custom_call.1} parent=5 // pred_check
        _
      $region10: #{tpu_custom_call.1} parent=5 // pred_check_branch
        %208 = sbr.rel (%p205) target = $region12
      $region11: #{tpu_custom_call.1} parent=5 // pred_region
        %s209 = ssub.s32 %s17, 1
        // Predicated region
        $region13: #{tpu_custom_call.1} parent=11 // pred_check
          %p210 = pneg %p64
        $region14: #{tpu_custom_call.1} parent=11 // pred_check_branch
          %212 = sbr.rel (%p210) target = $region16
        $region15: #{tpu_custom_call.1} parent=11 // pred_region
          _
        $region16: #{tpu_custom_call.1} parent=11 // pred_fallthru
          _
        // Predicated region
        $region17: #{tpu_custom_call.1} parent=11 // pred_check
          %p213 = pneg %p85
        $region18: #{tpu_custom_call.1} parent=11 // pred_check_branch
          %215 = sbr.rel (%p213) target = $region20
        $region19: #{tpu_custom_call.1} parent=11 // pred_region
          _
        $region20: #{tpu_custom_call.1} parent=11 // pred_fallthru
          _
        // Predicated region
        $region21: #{tpu_custom_call.1} parent=11 // pred_check
          %p216 = pneg %p106
        $region22: #{tpu_custom_call.1} parent=11 // pred_check_branch
          %218 = sbr.rel (%p216) target = $region24
        $region23: #{tpu_custom_call.1} parent=11 // pred_region
          _
        $region24: #{tpu_custom_call.1} parent=11 // pred_fallthru
          _
        // Predicated region
        $region25: #{tpu_custom_call.1} parent=11 // pred_check
          %p219 = pneg %p127
        $region26: #{tpu_custom_call.1} parent=11 // pred_check_branch
          %221 = sbr.rel (%p219) target = $region28
        $region27: #{tpu_custom_call.1} parent=11 // pred_region
          _
        $region28: #{tpu_custom_call.1} parent=11 // pred_fallthru
          _
        // Predicated region
        $region29: #{tpu_custom_call.1} parent=11 // pred_check
          %p222 = pneg %p148
        $region30: #{tpu_custom_call.1} parent=11 // pred_check_branch
          %224 = sbr.rel (%p222) target = $region32
        $region31: #{tpu_custom_call.1} parent=11 // pred_region
          _
        $region32: #{tpu_custom_call.1} parent=11 // pred_fallthru
          _
        // Predicated region
        $region33: #{tpu_custom_call.1} parent=11 // pred_check
          %p225 = pneg %p169
        $region34: #{tpu_custom_call.1} parent=11 // pred_check_branch
          %227 = sbr.rel (%p225) target = $region36
        $region35: #{tpu_custom_call.1} parent=11 // pred_region
          _
        $region36: #{tpu_custom_call.1} parent=11 // pred_fallthru
          _
      $region12: #{tpu_custom_call.1} parent=5 // pred_fallthru
        _
      %p228 = scmp.lt.s32.totalorder %s17, 2
      // Predicated region
      $region37: #{tpu_custom_call.1} parent=5 // pred_check
        %p229 = pneg %p228
      $region38: #{tpu_custom_call.1} parent=5 // pred_check_branch
        %231 = sbr.rel (%p229) target = $region40
      $region39: #{tpu_custom_call.1} parent=5 // pred_region
        // Predicated region
        $region41: #{tpu_custom_call.1} parent=39 // pred_check
          %p232 = pneg %p37
        $region42: #{tpu_custom_call.1} parent=39 // pred_check_branch
          %234 = sbr.rel (%p232) target = $region44
        $region43: #{tpu_custom_call.1} parent=39 // pred_region
          %s235 = smul.u32 32, %s17
          %p236 = scmp.lt.s32.totalorder %s235, 63
          %s237 = scalar_select %p236, %s235, 63
          %s238 = smul.addr %s237, 8
          %s239 = scalar_lea.vmem %s0, %s238
          %s240 = smul.u32 32, %s17
        $region44: #{tpu_custom_call.1} parent=39 // pred_fallthru
          _
      $region40: #{tpu_custom_call.1} parent=5 // pred_fallthru
        _
      %p241 = scmp.le.s32.totalorder 1, %s17
      %p242 = scmp.lt.s32.totalorder %s17, 3
      %p243 = pnand %p241, %p242
      %p244 = pneg %p243
      // Predicated region
      $region45: #{tpu_custom_call.1} parent=5 // pred_check
        _
      $region46: #{tpu_custom_call.1} parent=5 // pred_check_branch
        %246 = sbr.rel (%p243) target = $region48
      $region47: #{tpu_custom_call.1} parent=5 // pred_region
        %s247 = ssub.s32 %s17, 1
        %s248 = smul.u32 32, %s22
        %p249 = scmp.lt.s32.totalorder %s248, 63
        %s250 = scalar_select %p249, %s248, 63
        %s251 = smul.addr %s250, 8
        %s252 = scalar_lea.vmem %s0, %s251
        %p253 = pneg %p43
        %p254 = pneg %p40
        %p255 = pneg %p64
        %p256 = pneg %p61
        %p257 = pneg %p85
        %p258 = pneg %p82
        %p259 = pneg %p106
        %p260 = pneg %p103
        %p261 = pneg %p127
        %p262 = pneg %p124
        %p263 = pneg %p148
        %p264 = pneg %p145
        %p265 = pneg %p169
        %p266 = pneg %p166
        %p267 = pneg %p195
        %p268 = pneg %p192
        %s269 = sand.u32 %s182, 1
        %s270 = scalar_lea.sflag [#allocation4], %s269
        %s271 = sand.u32 %s182, 1
        %s272 = smul.addr %s271, 2
        %s273 = scalar_lea.vmem [#allocation3], %s272
        %s274 = smul.u32 32, %s22
        %p275 = scmp.lt.s32.totalorder %s274, 63
        %s276 = scalar_select %p275, %s274, 63
        %s277 = smul.addr %s276, 8
        %s278 = scalar_lea.vmem %s0, %s277
        %s279 = smul.u32 32, %s22
        %s280 = smul.u32 2, %s22
        %v281 = vld [vmem:[%s278] sm:$0xff]
        %v282 = vld [vmem:[%s278 + $0x8] sm:$0xff]
        %v283 = vld [vmem:[%s278 + $0x10] sm:$0xff]
        %v284 = vld [vmem:[%s278 + $0x18] sm:$0xff]
        %v285 = vld [vmem:[%s278 + $0x20] sm:$0xff]
        %v286 = vld [vmem:[%s278 + $0x28] sm:$0xff]
        %v287 = vld [vmem:[%s278 + $0x30] sm:$0xff]
        %v288 = vld [vmem:[%s278 + $0x38] sm:$0xff]
        %v289 = vld [vmem:[%s278 + $0x40] sm:$0xff]
        %v290 = vld [vmem:[%s278 + $0x48] sm:$0xff]
        %v291 = vld [vmem:[%s278 + $0x50] sm:$0xff]
        %v292 = vld [vmem:[%s278 + $0x58] sm:$0xff]
        %v293 = vld [vmem:[%s278 + $0x60] sm:$0xff]
        %v294 = vld [vmem:[%s278 + $0x68] sm:$0xff]
        %v295 = vld [vmem:[%s278 + $0x70] sm:$0xff]
        %v296 = vld [vmem:[%s278 + $0x78] sm:$0xff]
        %v297 = vld [vmem:[%s278 + $0x80] sm:$0xff]
        %v298 = vld [vmem:[%s278 + $0x88] sm:$0xff]
        %v299 = vld [vmem:[%s278 + $0x90] sm:$0xff]
        %v300 = vld [vmem:[%s278 + $0x98] sm:$0xff]
        %v301 = vld [vmem:[%s278 + $0xa0] sm:$0xff]
        %v302 = vld [vmem:[%s278 + $0xa8] sm:$0xff]
        %v303 = vld [vmem:[%s278 + $0xb0] sm:$0xff]
        %v304 = vld [vmem:[%s278 + $0xb8] sm:$0xff]
        %v305 = vld [vmem:[%s278 + $0xc0] sm:$0xff]
        %v306 = vld [vmem:[%s278 + $0xc8] sm:$0xff]
        %v307 = vld [vmem:[%s278 + $0xd0] sm:$0xff]
        %v308 = vld [vmem:[%s278 + $0xd8] sm:$0xff]
        %v309 = vld [vmem:[%s278 + $0xe0] sm:$0xff]
        %v310 = vld [vmem:[%s278 + $0xe8] sm:$0xff]
        %v311 = vld [vmem:[%s278 + $0xf0] sm:$0xff]
        %v312 = vld [vmem:[%s278 + $0xf8] sm:$0xff]
        %vm313 = vcmask 261120
        %v314 = vsel %vm313, %v281, 0.0
        %315 = vadd.xlane.f32.xlu0 %v314
        %v316 = vpop.xlane.xlu0 %315
        %v317 = vsel %vm313, %v282, 0.0
        %318 = vadd.xlane.f32.xlu0 %v317
        %v319 = vpop.xlane.xlu0 %318
        %v320 = vsel %vm313, %v283, 0.0
        %321 = vadd.xlane.f32.xlu0 %v320
        %v322 = vpop.xlane.xlu0 %321
        %v323 = vsel %vm313, %v284, 0.0
        %324 = vadd.xlane.f32.xlu0 %v323
        %v325 = vpop.xlane.xlu0 %324
        %v326 = vsel %vm313, %v285, 0.0
        %327 = vadd.xlane.f32.xlu0 %v326
        %v328 = vpop.xlane.xlu0 %327
        %v329 = vsel %vm313, %v286, 0.0
        %330 = vadd.xlane.f32.xlu0 %v329
        %v331 = vpop.xlane.xlu0 %330
        %v332 = vsel %vm313, %v287, 0.0
        %333 = vadd.xlane.f32.xlu0 %v332
        %v334 = vpop.xlane.xlu0 %333
        %v335 = vsel %vm313, %v288, 0.0
        %336 = vadd.xlane.f32.xlu0 %v335
        %v337 = vpop.xlane.xlu0 %336
        %v338 = vsel %vm313, %v289, 0.0
        %339 = vadd.xlane.f32.xlu0 %v338
        %v340 = vpop.xlane.xlu0 %339
        %v341 = vsel %vm313, %v290, 0.0
        %342 = vadd.xlane.f32.xlu0 %v341
        %v343 = vpop.xlane.xlu0 %342
        %v344 = vsel %vm313, %v291, 0.0
        %345 = vadd.xlane.f32.xlu0 %v344
        %v346 = vpop.xlane.xlu0 %345
        %v347 = vsel %vm313, %v292, 0.0
        %348 = vadd.xlane.f32.xlu0 %v347
        %v349 = vpop.xlane.xlu0 %348
        %v350 = vsel %vm313, %v293, 0.0
        %351 = vadd.xlane.f32.xlu0 %v350
        %v352 = vpop.xlane.xlu0 %351
        %v353 = vsel %vm313, %v294, 0.0
        %354 = vadd.xlane.f32.xlu0 %v353
        %v355 = vpop.xlane.xlu0 %354
        %v356 = vsel %vm313, %v295, 0.0
        %357 = vadd.xlane.f32.xlu0 %v356
        %v358 = vpop.xlane.xlu0 %357
        %v359 = vsel %vm313, %v296, 0.0
        %360 = vadd.xlane.f32.xlu0 %v359
        %v361 = vpop.xlane.xlu0 %360
        %v362 = vsel %vm313, %v297, 0.0
        %363 = vadd.xlane.f32.xlu0 %v362
        %v364 = vpop.xlane.xlu0 %363
        %v365 = vsel %vm313, %v298, 0.0
        %366 = vadd.xlane.f32.xlu0 %v365
        %v367 = vpop.xlane.xlu0 %366
        %v368 = vsel %vm313, %v299, 0.0
        %369 = vadd.xlane.f32.xlu0 %v368
        %v370 = vpop.xlane.xlu0 %369
        %v371 = vsel %vm313, %v300, 0.0
        %372 = vadd.xlane.f32.xlu0 %v371
        %v373 = vpop.xlane.xlu0 %372
        %v374 = vsel %vm313, %v301, 0.0
        %375 = vadd.xlane.f32.xlu0 %v374
        %v376 = vpop.xlane.xlu0 %375
        %v377 = vsel %vm313, %v302, 0.0
        %378 = vadd.xlane.f32.xlu0 %v377
        %v379 = vpop.xlane.xlu0 %378
        %v380 = vsel %vm313, %v303, 0.0
        %381 = vadd.xlane.f32.xlu0 %v380
        %v382 = vpop.xlane.xlu0 %381
        %v383 = vsel %vm313, %v304, 0.0
        %384 = vadd.xlane.f32.xlu0 %v383
        %v385 = vpop.xlane.xlu0 %384
        %v386 = vsel %vm313, %v305, 0.0
        %387 = vadd.xlane.f32.xlu0 %v386
        %v388 = vpop.xlane.xlu0 %387
        %v389 = vsel %vm313, %v306, 0.0
        %390 = vadd.xlane.f32.xlu0 %v389
        %v391 = vpop.xlane.xlu0 %390
        %v392 = vsel %vm313, %v307, 0.0
        %393 = vadd.xlane.f32.xlu0 %v392
        %v394 = vpop.xlane.xlu0 %393
        %v395 = vsel %vm313, %v308, 0.0
        %396 = vadd.xlane.f32.xlu0 %v395
        %v397 = vpop.xlane.xlu0 %396
        %v398 = vsel %vm313, %v309, 0.0
        %399 = vadd.xlane.f32.xlu0 %v398
        %v400 = vpop.xlane.xlu0 %399
        %v401 = vsel %vm313, %v310, 0.0
        %402 = vadd.xlane.f32.xlu0 %v401
        %v403 = vpop.xlane.xlu0 %402
        %v404 = vsel %vm313, %v311, 0.0
        %405 = vadd.xlane.f32.xlu0 %v404
        %v406 = vpop.xlane.xlu0 %405
        %v407 = vsel %vm313, %v312, 0.0
        %408 = vadd.xlane.f32.xlu0 %v407
        %v409 = vpop.xlane.xlu0 %408
        %v410 = vrcp.pop 32.0
        %v411 = vmul.f32 %v316, %v410
        %v412 = vmul.f32 %v319, %v410
        %v413 = vmul.f32 %v322, %v410
        %v414 = vmul.f32 %v325, %v410
        %v415 = vmul.f32 %v328, %v410
        %v416 = vmul.f32 %v331, %v410
        %v417 = vmul.f32 %v334, %v410
        %v418 = vmul.f32 %v337, %v410
        %v419 = vmul.f32 %v340, %v410
        %v420 = vmul.f32 %v343, %v410
        %v421 = vmul.f32 %v346, %v410
        %v422 = vmul.f32 %v349, %v410
        %v423 = vmul.f32 %v352, %v410
        %v424 = vmul.f32 %v355, %v410
        %v425 = vmul.f32 %v358, %v410
        %v426 = vmul.f32 %v361, %v410
        %v427 = vmul.f32 %v364, %v410
        %v428 = vmul.f32 %v367, %v410
        %v429 = vmul.f32 %v370, %v410
        %v430 = vmul.f32 %v373, %v410
        %v431 = vmul.f32 %v376, %v410
        %v432 = vmul.f32 %v379, %v410
        %v433 = vmul.f32 %v382, %v410
        %v434 = vmul.f32 %v385, %v410
        %v435 = vmul.f32 %v388, %v410
        %v436 = vmul.f32 %v391, %v410
        %v437 = vmul.f32 %v394, %v410
        %v438 = vmul.f32 %v397, %v410
        %v439 = vmul.f32 %v400, %v410
        %v440 = vmul.f32 %v403, %v410
        %v441 = vmul.f32 %v406, %v410
        %v442 = vmul.f32 %v409, %v410
        %v443 = vsub.f32 %v281, %v411
        %v444 = vsub.f32 %v282, %v412
        %v445 = vsub.f32 %v283, %v413
        %v446 = vsub.f32 %v284, %v414
        %v447 = vsub.f32 %v285, %v415
        %v448 = vsub.f32 %v286, %v416
        %v449 = vsub.f32 %v287, %v417
        %v450 = vsub.f32 %v288, %v418
        %v451 = vsub.f32 %v289, %v419
        %v452 = vsub.f32 %v290, %v420
        %v453 = vsub.f32 %v291, %v421
        %v454 = vsub.f32 %v292, %v422
        %v455 = vsub.f32 %v293, %v423
        %v456 = vsub.f32 %v294, %v424
        %v457 = vsub.f32 %v295, %v425
        %v458 = vsub.f32 %v296, %v426
        %v459 = vsub.f32 %v297, %v427
        %v460 = vsub.f32 %v298, %v428
        %v461 = vsub.f32 %v299, %v429
        %v462 = vsub.f32 %v300, %v430
        %v463 = vsub.f32 %v301, %v431
        %v464 = vsub.f32 %v302, %v432
        %v465 = vsub.f32 %v303, %v433
        %v466 = vsub.f32 %v304, %v434
        %v467 = vsub.f32 %v305, %v435
        %v468 = vsub.f32 %v306, %v436
        %v469 = vsub.f32 %v307, %v437
        %v470 = vsub.f32 %v308, %v438
        %v471 = vsub.f32 %v309, %v439
        %v472 = vsub.f32 %v310, %v440
        %v473 = vsub.f32 %v311, %v441
        %v474 = vsub.f32 %v312, %v442
        %v475 = vmul.f32 %v443, %v443
        %v476 = vmul.f32 %v444, %v444
        %v477 = vmul.f32 %v445, %v445
        %v478 = vmul.f32 %v446, %v446
        %v479 = vmul.f32 %v447, %v447
        %v480 = vmul.f32 %v448, %v448
        %v481 = vmul.f32 %v449, %v449
        %v482 = vmul.f32 %v450, %v450
        %v483 = vmul.f32 %v451, %v451
        %v484 = vmul.f32 %v452, %v452
        %v485 = vmul.f32 %v453, %v453
        %v486 = vmul.f32 %v454, %v454
        %v487 = vmul.f32 %v455, %v455
        %v488 = vmul.f32 %v456, %v456
        %v489 = vmul.f32 %v457, %v457
        %v490 = vmul.f32 %v458, %v458
        %v491 = vmul.f32 %v459, %v459
        %v492 = vmul.f32 %v460, %v460
        %v493 = vmul.f32 %v461, %v461
        %v494 = vmul.f32 %v462, %v462
        %v495 = vmul.f32 %v463, %v463
        %v496 = vmul.f32 %v464, %v464
        %v497 = vmul.f32 %v465, %v465
        %v498 = vmul.f32 %v466, %v466
        %v499 = vmul.f32 %v467, %v467
        %v500 = vmul.f32 %v468, %v468
        %v501 = vmul.f32 %v469, %v469
        %v502 = vmul.f32 %v470, %v470
        %v503 = vmul.f32 %v471, %v471
        %v504 = vmul.f32 %v472, %v472
        %v505 = vmul.f32 %v473, %v473
        %v506 = vmul.f32 %v474, %v474
        %v507 = vsel %vm313, %v475, 0.0
        %508 = vadd.xlane.f32.xlu0 %v507
        %v509 = vpop.xlane.xlu0 %508
        %v510 = vsel %vm313, %v476, 0.0
        %511 = vadd.xlane.f32.xlu0 %v510
        %v512 = vpop.xlane.xlu0 %511
        %v513 = vsel %vm313, %v477, 0.0
        %514 = vadd.xlane.f32.xlu0 %v513
        %v515 = vpop.xlane.xlu0 %514
        %v516 = vsel %vm313, %v478, 0.0
        %517 = vadd.xlane.f32.xlu0 %v516
        %v518 = vpop.xlane.xlu0 %517
        %v519 = vsel %vm313, %v479, 0.0
        %520 = vadd.xlane.f32.xlu0 %v519
        %v521 = vpop.xlane.xlu0 %520
        %v522 = vsel %vm313, %v480, 0.0
        %523 = vadd.xlane.f32.xlu0 %v522
        %v524 = vpop.xlane.xlu0 %523
        %v525 = vsel %vm313, %v481, 0.0
        %526 = vadd.xlane.f32.xlu0 %v525
        %v527 = vpop.xlane.xlu0 %526
        %v528 = vsel %vm313, %v482, 0.0
        %529 = vadd.xlane.f32.xlu0 %v528
        %v530 = vpop.xlane.xlu0 %529
        %v531 = vsel %vm313, %v483, 0.0
        %532 = vadd.xlane.f32.xlu0 %v531
        %v533 = vpop.xlane.xlu0 %532
        %v534 = vsel %vm313, %v484, 0.0
        %535 = vadd.xlane.f32.xlu0 %v534
        %v536 = vpop.xlane.xlu0 %535
        %v537 = vsel %vm313, %v485, 0.0
        %538 = vadd.xlane.f32.xlu0 %v537
        %v539 = vpop.xlane.xlu0 %538
        %v540 = vsel %vm313, %v486, 0.0
        %541 = vadd.xlane.f32.xlu0 %v540
        %v542 = vpop.xlane.xlu0 %541
        %v543 = vsel %vm313, %v487, 0.0
        %544 = vadd.xlane.f32.xlu0 %v543
        %v545 = vpop.xlane.xlu0 %544
        %v546 = vsel %vm313, %v488, 0.0
        %547 = vadd.xlane.f32.xlu0 %v546
        %v548 = vpop.xlane.xlu0 %547
        %v549 = vsel %vm313, %v489, 0.0
        %550 = vadd.xlane.f32.xlu0 %v549
        %v551 = vpop.xlane.xlu0 %550
        %v552 = vsel %vm313, %v490, 0.0
        %553 = vadd.xlane.f32.xlu0 %v552
        %v554 = vpop.xlane.xlu0 %553
        %v555 = vsel %vm313, %v491, 0.0
        %556 = vadd.xlane.f32.xlu0 %v555
        %v557 = vpop.xlane.xlu0 %556
        %v558 = vsel %vm313, %v492, 0.0
        %559 = vadd.xlane.f32.xlu0 %v558
        %v560 = vpop.xlane.xlu0 %559
        %v561 = vsel %vm313, %v493, 0.0
        %562 = vadd.xlane.f32.xlu0 %v561
        %v563 = vpop.xlane.xlu0 %562
        %v564 = vsel %vm313, %v494, 0.0
        %565 = vadd.xlane.f32.xlu0 %v564
        %v566 = vpop.xlane.xlu0 %565
        %v567 = vsel %vm313, %v495, 0.0
        %568 = vadd.xlane.f32.xlu0 %v567
        %v569 = vpop.xlane.xlu0 %568
        %v570 = vsel %vm313, %v496, 0.0
        %571 = vadd.xlane.f32.xlu0 %v570
        %v572 = vpop.xlane.xlu0 %571
        %v573 = vsel %vm313, %v497, 0.0
        %574 = vadd.xlane.f32.xlu0 %v573
        %v575 = vpop.xlane.xlu0 %574
        %v576 = vsel %vm313, %v498, 0.0
        %577 = vadd.xlane.f32.xlu0 %v576
        %v578 = vpop.xlane.xlu0 %577
        %v579 = vsel %vm313, %v499, 0.0
        %580 = vadd.xlane.f32.xlu0 %v579
        %v581 = vpop.xlane.xlu0 %580
        %v582 = vsel %vm313, %v500, 0.0
        %583 = vadd.xlane.f32.xlu0 %v582
        %v584 = vpop.xlane.xlu0 %583
        %v585 = vsel %vm313, %v501, 0.0
        %586 = vadd.xlane.f32.xlu0 %v585
        %v587 = vpop.xlane.xlu0 %586
        %v588 = vsel %vm313, %v502, 0.0
        %589 = vadd.xlane.f32.xlu0 %v588
        %v590 = vpop.xlane.xlu0 %589
        %v591 = vsel %vm313, %v503, 0.0
        %592 = vadd.xlane.f32.xlu0 %v591
        %v593 = vpop.xlane.xlu0 %592
        %v594 = vsel %vm313, %v504, 0.0
        %595 = vadd.xlane.f32.xlu0 %v594
        %v596 = vpop.xlane.xlu0 %595
        %v597 = vsel %vm313, %v505, 0.0
        %598 = vadd.xlane.f32.xlu0 %v597
        %v599 = vpop.xlane.xlu0 %598
        %v600 = vsel %vm313, %v506, 0.0
        %601 = vadd.xlane.f32.xlu0 %v600
        %v602 = vpop.xlane.xlu0 %601
        %v603 = vmul.f32 %v509, %v410
        %v604 = vmul.f32 %v512, %v410
        %v605 = vmul.f32 %v515, %v410
        %v606 = vmul.f32 %v518, %v410
        %v607 = vmul.f32 %v521, %v410
        %v608 = vmul.f32 %v524, %v410
        %v609 = vmul.f32 %v527, %v410
        %v610 = vmul.f32 %v530, %v410
        %v611 = vmul.f32 %v533, %v410
        %v612 = vmul.f32 %v536, %v410
        %v613 = vmul.f32 %v539, %v410
        %v614 = vmul.f32 %v542, %v410
        %v615 = vmul.f32 %v545, %v410
        %v616 = vmul.f32 %v548, %v410
        %v617 = vmul.f32 %v551, %v410
        %v618 = vmul.f32 %v554, %v410
        %v619 = vmul.f32 %v557, %v410
        %v620 = vmul.f32 %v560, %v410
        %v621 = vmul.f32 %v563, %v410
        %v622 = vmul.f32 %v566, %v410
        %v623 = vmul.f32 %v569, %v410
        %v624 = vmul.f32 %v572, %v410
        %v625 = vmul.f32 %v575, %v410
        %v626 = vmul.f32 %v578, %v410
        %v627 = vmul.f32 %v581, %v410
        %v628 = vmul.f32 %v584, %v410
        %v629 = vmul.f32 %v587, %v410
        %v630 = vmul.f32 %v590, %v410
        %v631 = vmul.f32 %v593, %v410
        %v632 = vmul.f32 %v596, %v410
        %v633 = vmul.f32 %v599, %v410
        %v634 = vmul.f32 %v602, %v410
        %v635 = vadd.f32 %v603, 1e-05
        %v636 = vadd.f32 %v604, 1e-05
        %v637 = vadd.f32 %v605, 1e-05
        %v638 = vadd.f32 %v606, 1e-05
        %v639 = vadd.f32 %v607, 1e-05
        %v640 = vadd.f32 %v608, 1e-05
        %v641 = vadd.f32 %v609, 1e-05
        %v642 = vadd.f32 %v610, 1e-05
        %v643 = vadd.f32 %v611, 1e-05
        %v644 = vadd.f32 %v612, 1e-05
        %v645 = vadd.f32 %v613, 1e-05
        %v646 = vadd.f32 %v614, 1e-05
        %v647 = vadd.f32 %v615, 1e-05
        %v648 = vadd.f32 %v616, 1e-05
        %v649 = vadd.f32 %v617, 1e-05
        %v650 = vadd.f32 %v618, 1e-05
        %v651 = vadd.f32 %v619, 1e-05
        %v652 = vadd.f32 %v620, 1e-05
        %v653 = vadd.f32 %v621, 1e-05
        %v654 = vadd.f32 %v622, 1e-05
        %v655 = vadd.f32 %v623, 1e-05
        %v656 = vadd.f32 %v624, 1e-05
        %v657 = vadd.f32 %v625, 1e-05
        %v658 = vadd.f32 %v626, 1e-05
        %v659 = vadd.f32 %v627, 1e-05
        %v660 = vadd.f32 %v628, 1e-05
        %v661 = vadd.f32 %v629, 1e-05
        %v662 = vadd.f32 %v630, 1e-05
        %v663 = vadd.f32 %v631, 1e-05
        %v664 = vadd.f32 %v632, 1e-05
        %v665 = vadd.f32 %v633, 1e-05
        %v666 = vadd.f32 %v634, 1e-05
        %v667 = vrsqrt.pop %v635
        %v668 = vrsqrt.pop %v636
        %v669 = vrsqrt.pop %v637
        %v670 = vrsqrt.pop %v638
        %v671 = vrsqrt.pop %v639
        %v672 = vrsqrt.pop %v640
        %v673 = vrsqrt.pop %v641
        %v674 = vrsqrt.pop %v642
        %v675 = vrsqrt.pop %v643
        %v676 = vrsqrt.pop %v644
        %v677 = vrsqrt.pop %v645
        %v678 = vrsqrt.pop %v646
        %v679 = vrsqrt.pop %v647
        %v680 = vrsqrt.pop %v648
        %v681 = vrsqrt.pop %v649
        %v682 = vrsqrt.pop %v650
        %v683 = vrsqrt.pop %v651
        %v684 = vrsqrt.pop %v652
        %v685 = vrsqrt.pop %v653
        %v686 = vrsqrt.pop %v654
        %v687 = vrsqrt.pop %v655
        %v688 = vrsqrt.pop %v656
        %v689 = vrsqrt.pop %v657
        %v690 = vrsqrt.pop %v658
        %v691 = vrsqrt.pop %v659
        %v692 = vrsqrt.pop %v660
        %v693 = vrsqrt.pop %v661
        %v694 = vrsqrt.pop %v662
        %v695 = vrsqrt.pop %v663
        %v696 = vrsqrt.pop %v664
        %v697 = vrsqrt.pop %v665
        %v698 = vrsqrt.pop %v666
        %v699 = vmul.f32 %v443, %v667
        %v700 = vmul.f32 %v444, %v668
        %v701 = vmul.f32 %v445, %v669
        %v702 = vmul.f32 %v446, %v670
        %v703 = vmul.f32 %v447, %v671
        %v704 = vmul.f32 %v448, %v672
        %v705 = vmul.f32 %v449, %v673
        %v706 = vmul.f32 %v450, %v674
        %v707 = vmul.f32 %v451, %v675
        %v708 = vmul.f32 %v452, %v676
        %v709 = vmul.f32 %v453, %v677
        %v710 = vmul.f32 %v454, %v678
        %v711 = vmul.f32 %v455, %v679
        %v712 = vmul.f32 %v456, %v680
        %v713 = vmul.f32 %v457, %v681
        %v714 = vmul.f32 %v458, %v682
        %v715 = vmul.f32 %v459, %v683
        %v716 = vmul.f32 %v460, %v684
        %v717 = vmul.f32 %v461, %v685
        %v718 = vmul.f32 %v462, %v686
        %v719 = vmul.f32 %v463, %v687
        %v720 = vmul.f32 %v464, %v688
        %v721 = vmul.f32 %v465, %v689
        %v722 = vmul.f32 %v466, %v690
        %v723 = vmul.f32 %v467, %v691
        %v724 = vmul.f32 %v468, %v692
        %v725 = vmul.f32 %v469, %v693
        %v726 = vmul.f32 %v470, %v694
        %v727 = vmul.f32 %v471, %v695
        %v728 = vmul.f32 %v472, %v696
        %v729 = vmul.f32 %v473, %v697
        %v730 = vmul.f32 %v474, %v698
        %v731 = vld [vmem:[%s1] sm:$0xff]
        %v732 = vld [vmem:[%s1 + $0x8] sm:$0xff]
        %v733 = vld [vmem:[%s1 + $0x10] sm:$0xff]
        %v734 = vld [vmem:[%s1 + $0x18] sm:$0xff]
        %v735 = vld [vmem:[%s2] sm:$0x1]
        %v737 = vlaneseq
        %v738 = vshrl.u32 %v737, 7
        %v739 = vsub.s32 0, %v738
        %v740 = vrot.slane %v735, %v739
        %v743 = vsel %vm313, %v699, 0
        %v746 = vsel %vm313, %v700, 0
        %v749 = vsel %vm313, %v701, 0
        %v752 = vsel %vm313, %v702, 0
        %v755 = vsel %vm313, %v703, 0
        %v758 = vsel %vm313, %v704, 0
        %v761 = vsel %vm313, %v705, 0
        %v764 = vsel %vm313, %v706, 0
        %v767 = vsel %vm313, %v707, 0
        %v770 = vsel %vm313, %v708, 0
        %v773 = vsel %vm313, %v709, 0
        %v776 = vsel %vm313, %v710, 0
        %v779 = vsel %vm313, %v711, 0
        %v782 = vsel %vm313, %v712, 0
        %v785 = vsel %vm313, %v713, 0
        %v788 = vsel %vm313, %v714, 0
        %v791 = vsel %vm313, %v715, 0
        %v794 = vsel %vm313, %v716, 0
        %v797 = vsel %vm313, %v717, 0
        %v800 = vsel %vm313, %v718, 0
        %v803 = vsel %vm313, %v719, 0
        %v806 = vsel %vm313, %v720, 0
        %v809 = vsel %vm313, %v721, 0
        %v812 = vsel %vm313, %v722, 0
        %v815 = vsel %vm313, %v723, 0
        %v818 = vsel %vm313, %v724, 0
        %v821 = vsel %vm313, %v725, 0
        %v824 = vsel %vm313, %v726, 0
        %v827 = vsel %vm313, %v727, 0
        %v830 = vsel %vm313, %v728, 0
        %v833 = vsel %vm313, %v729, 0
        %v836 = vsel %vm313, %v730, 0
        %838 = vmatprep.subr.mxu0 0.0
        %839 = vmatpush1.msra.mxu0 0.0
        %840 = vmatprep.subr.mxu0 0.0
        %841 = vmatpush1.msra.mxu0 0.0
        %842 = vmatprep.subr.mxu0 0.0
        %843 = vmatpush1.msra.mxu0 0.0
        %844 = vmatprep.subr.mxu0 0.0
        %845 = vmatpush1.msra.mxu0 0.0
        %846 = vmatprep.subr.mxu0 0.0
        %847 = vmatpush1.msra.mxu0 0.0
        %848 = vmatprep.subr.mxu0 0.0
        %849 = vmatpush1.msra.mxu0 0.0
        %850 = vmatprep.subr.mxu0 0.0
        %851 = vmatpush1.msra.mxu0 0.0
        %852 = vmatprep.subr.mxu0 0.0
        %853 = vmatpush1.msra.mxu0 0.0
        %854 = vmatprep.subr.mxu0 0.0
        %855 = vmatpush1.msra.mxu0 0.0
        %856 = vmatprep.subr.mxu0 0.0
        %857 = vmatpush1.msra.mxu0 0.0
        %858 = vmatprep.subr.mxu0 0.0
        %859 = vmatpush1.msra.mxu0 0.0
        %860 = vmatprep.subr.mxu0 0.0
        %861 = vmatpush1.msra.mxu0 0.0
        %862 = vmatprep.subr.mxu0 0.0
        %863 = vmatpush1.msra.mxu0 %v734
        %864 = vmatprep.subr.mxu0 0.0
        %865 = vmatpush1.msra.mxu0 %v733
        %866 = vmatprep.subr.mxu0 0.0
        %867 = vmatpush1.msra.mxu0 %v732
        %868 = vmatprep.subr.mxu0 0.0
        %869 = vmatpush1.msra.mxu0 %v731
        %870 = vmatprep.subr.mxu0 0.0
        %871 = vmatpush2.msra.mxu0 0.0
        %872 = vmatprep.subr.mxu0 0.0
        %873 = vmatpush2.msra.mxu0 0.0
        %874 = vmatprep.subr.mxu0 0.0
        %875 = vmatpush2.msra.mxu0 0.0
        %876 = vmatprep.subr.mxu0 0.0
        %877 = vmatpush2.msra.mxu0 0.0
        %878 = vmatprep.subr.mxu0 0.0
        %879 = vmatpush2.msra.mxu0 0.0
        %880 = vmatprep.subr.mxu0 0.0
        %881 = vmatpush2.msra.mxu0 0.0
        %882 = vmatprep.subr.mxu0 0.0
        %883 = vmatpush2.msra.mxu0 0.0
        %884 = vmatprep.subr.mxu0 0.0
        %885 = vmatpush2.msra.mxu0 0.0
        %886 = vmatprep.subr.mxu0 0.0
        %887 = vmatpush2.msra.mxu0 0.0
        %888 = vmatprep.subr.mxu0 0.0
        %889 = vmatpush2.msra.mxu0 0.0
        %890 = vmatprep.subr.mxu0 0.0
        %891 = vmatpush2.msra.mxu0 0.0
        %892 = vmatprep.subr.mxu0 0.0
        %893 = vmatpush2.msra.mxu0 0.0
        %894 = vmatprep.subr.mxu0 0.0
        %895 = vmatpush2.msra.mxu0 0.0
        %896 = vmatprep.subr.mxu0 0.0
        %897 = vmatpush2.msra.mxu0 0.0
        %898 = vmatprep.subr.mxu0 0.0
        %899 = vmatpush2.msra.mxu0 0.0
        %900 = vmatprep.subr.mxu0 0.0
        %901 = vmatpush2.msra.mxu0 0.0
        %902 = vmatprep.mubr.f32.mxu0 0.0
        %903 = vmatmul.mubr.f32.gmra.mxu0 %v743
        %v904 = vpop.f32.mrf.mxu0
        %v905 = vadd.f32 %v740, %v904
        %v906 = vpop.f32.mrf.mxu0
        %907 = vmatprep.mubr.f32.mxu0 0.0
        %908 = vmatmul.mubr.f32.gmra.mxu0 %v746
        %v909 = vpop.f32.mrf.mxu0
        %v910 = vadd.f32 %v740, %v909
        %v911 = vpop.f32.mrf.mxu0
        %912 = vmatprep.mubr.f32.mxu0 0.0
        %913 = vmatmul.mubr.f32.gmra.mxu0 %v749
        %v914 = vpop.f32.mrf.mxu0
        %v915 = vadd.f32 %v740, %v914
        %v916 = vpop.f32.mrf.mxu0
        %917 = vmatprep.mubr.f32.mxu0 0.0
        %918 = vmatmul.mubr.f32.gmra.mxu0 %v752
        %v919 = vpop.f32.mrf.mxu0
        %v920 = vadd.f32 %v740, %v919
        %v921 = vpop.f32.mrf.mxu0
        %922 = vmatprep.mubr.f32.mxu0 0.0
        %923 = vmatmul.mubr.f32.gmra.mxu0 %v755
        %v924 = vpop.f32.mrf.mxu0
        %v925 = vadd.f32 %v740, %v924
        %v926 = vpop.f32.mrf.mxu0
        %927 = vmatprep.mubr.f32.mxu0 0.0
        %928 = vmatmul.mubr.f32.gmra.mxu0 %v758
        %v929 = vpop.f32.mrf.mxu0
        %v930 = vadd.f32 %v740, %v929
        %v931 = vpop.f32.mrf.mxu0
        %932 = vmatprep.mubr.f32.mxu0 0.0
        %933 = vmatmul.mubr.f32.gmra.mxu0 %v761
        %v934 = vpop.f32.mrf.mxu0
        %v935 = vadd.f32 %v740, %v934
        %v936 = vpop.f32.mrf.mxu0
        %937 = vmatprep.mubr.f32.mxu0 0.0
        %938 = vmatmul.mubr.f32.gmra.mxu0 %v764
        %v939 = vpop.f32.mrf.mxu0
        %v940 = vadd.f32 %v740, %v939
        %v941 = vpop.f32.mrf.mxu0
        %942 = vmatprep.mubr.f32.mxu0 0.0
        %943 = vmatmul.mubr.f32.gmra.mxu0 %v767
        %v944 = vpop.f32.mrf.mxu0
        %v945 = vadd.f32 %v740, %v944
        %v946 = vpop.f32.mrf.mxu0
        %947 = vmatprep.mubr.f32.mxu0 0.0
        %948 = vmatmul.mubr.f32.gmra.mxu0 %v770
        %v949 = vpop.f32.mrf.mxu0
        %v950 = vadd.f32 %v740, %v949
        %v951 = vpop.f32.mrf.mxu0
        %952 = vmatprep.mubr.f32.mxu0 0.0
        %953 = vmatmul.mubr.f32.gmra.mxu0 %v773
        %v954 = vpop.f32.mrf.mxu0
        %v955 = vadd.f32 %v740, %v954
        %v956 = vpop.f32.mrf.mxu0
        %957 = vmatprep.mubr.f32.mxu0 0.0
        %958 = vmatmul.mubr.f32.gmra.mxu0 %v776
        %v959 = vpop.f32.mrf.mxu0
        %v960 = vadd.f32 %v740, %v959
        %v961 = vpop.f32.mrf.mxu0
        %962 = vmatprep.mubr.f32.mxu0 0.0
        %963 = vmatmul.mubr.f32.gmra.mxu0 %v779
        %v964 = vpop.f32.mrf.mxu0
        %v965 = vadd.f32 %v740, %v964
        %v966 = vpop.f32.mrf.mxu0
        %967 = vmatprep.mubr.f32.mxu0 0.0
        %968 = vmatmul.mubr.f32.gmra.mxu0 %v782
        %v969 = vpop.f32.mrf.mxu0
        %v970 = vadd.f32 %v740, %v969
        %v971 = vpop.f32.mrf.mxu0
        %972 = vmatprep.mubr.f32.mxu0 0.0
        %973 = vmatmul.mubr.f32.gmra.mxu0 %v785
        %v974 = vpop.f32.mrf.mxu0
        %v975 = vadd.f32 %v740, %v974
        %v976 = vpop.f32.mrf.mxu0
        %977 = vmatprep.mubr.f32.mxu0 0.0
        %978 = vmatmul.mubr.f32.gmra.mxu0 %v788
        %v979 = vpop.f32.mrf.mxu0
        %v980 = vadd.f32 %v740, %v979
        %v981 = vpop.f32.mrf.mxu0
        %982 = vmatprep.mubr.f32.mxu0 0.0
        %983 = vmatmul.mubr.f32.gmra.mxu0 %v791
        %v984 = vpop.f32.mrf.mxu0
        %v985 = vadd.f32 %v740, %v984
        %v986 = vpop.f32.mrf.mxu0
        %987 = vmatprep.mubr.f32.mxu0 0.0
        %988 = vmatmul.mubr.f32.gmra.mxu0 %v794
        %v989 = vpop.f32.mrf.mxu0
        %v990 = vadd.f32 %v740, %v989
        %v991 = vpop.f32.mrf.mxu0
        %992 = vmatprep.mubr.f32.mxu0 0.0
        %993 = vmatmul.mubr.f32.gmra.mxu0 %v797
        %v994 = vpop.f32.mrf.mxu0
        %v995 = vadd.f32 %v740, %v994
        %v996 = vpop.f32.mrf.mxu0
        %997 = vmatprep.mubr.f32.mxu0 0.0
        %998 = vmatmul.mubr.f32.gmra.mxu0 %v800
        %v999 = vpop.f32.mrf.mxu0
        %v1000 = vadd.f32 %v740, %v999
        %v1001 = vpop.f32.mrf.mxu0
        %1002 = vmatprep.mubr.f32.mxu0 0.0
        %1003 = vmatmul.mubr.f32.gmra.mxu0 %v803
        %v1004 = vpop.f32.mrf.mxu0
        %v1005 = vadd.f32 %v740, %v1004
        %v1006 = vpop.f32.mrf.mxu0
        %1007 = vmatprep.mubr.f32.mxu0 0.0
        %1008 = vmatmul.mubr.f32.gmra.mxu0 %v806
        %v1009 = vpop.f32.mrf.mxu0
        %v1010 = vadd.f32 %v740, %v1009
        %v1011 = vpop.f32.mrf.mxu0
        %1012 = vmatprep.mubr.f32.mxu0 0.0
        %1013 = vmatmul.mubr.f32.gmra.mxu0 %v809
        %v1014 = vpop.f32.mrf.mxu0
        %v1015 = vadd.f32 %v740, %v1014
        %v1016 = vpop.f32.mrf.mxu0
        %1017 = vmatprep.mubr.f32.mxu0 0.0
        %1018 = vmatmul.mubr.f32.gmra.mxu0 %v812
        %v1019 = vpop.f32.mrf.mxu0
        %v1020 = vadd.f32 %v740, %v1019
        %v1021 = vpop.f32.mrf.mxu0
        %1022 = vmatprep.mubr.f32.mxu0 0.0
        %1023 = vmatmul.mubr.f32.gmra.mxu0 %v815
        %v1024 = vpop.f32.mrf.mxu0
        %v1025 = vadd.f32 %v740, %v1024
        %v1026 = vpop.f32.mrf.mxu0
        %1027 = vmatprep.mubr.f32.mxu0 0.0
        %1028 = vmatmul.mubr.f32.gmra.mxu0 %v818
        %v1029 = vpop.f32.mrf.mxu0
        %v1030 = vadd.f32 %v740, %v1029
        %v1031 = vpop.f32.mrf.mxu0
        %1032 = vmatprep.mubr.f32.mxu0 0.0
        %1033 = vmatmul.mubr.f32.gmra.mxu0 %v821
        %v1034 = vpop.f32.mrf.mxu0
        %v1035 = vadd.f32 %v740, %v1034
        %v1036 = vpop.f32.mrf.mxu0
        %1037 = vmatprep.mubr.f32.mxu0 0.0
        %1038 = vmatmul.mubr.f32.gmra.mxu0 %v824
        %v1039 = vpop.f32.mrf.mxu0
        %v1040 = vadd.f32 %v740, %v1039
        %v1041 = vpop.f32.mrf.mxu0
        %1042 = vmatprep.mubr.f32.mxu0 0.0
        %1043 = vmatmul.mubr.f32.gmra.mxu0 %v827
        %v1044 = vpop.f32.mrf.mxu0
        %v1045 = vadd.f32 %v740, %v1044
        %v1046 = vpop.f32.mrf.mxu0
        %1047 = vmatprep.mubr.f32.mxu0 0.0
        %1048 = vmatmul.mubr.f32.gmra.mxu0 %v830
        %v1049 = vpop.f32.mrf.mxu0
        %v1050 = vadd.f32 %v740, %v1049
        %v1051 = vpop.f32.mrf.mxu0
        %1052 = vmatprep.mubr.f32.mxu0 0.0
        %1053 = vmatmul.mubr.f32.gmra.mxu0 %v833
        %v1054 = vpop.f32.mrf.mxu0
        %v1055 = vadd.f32 %v740, %v1054
        %v1056 = vpop.f32.mrf.mxu0
        %1057 = vmatprep.mubr.f32.mxu0 0.0
        %1058 = vmatmul.mubr.f32.gmra.mxu0 %v836
        %v1059 = vpop.f32.mrf.mxu0
        %v1060 = vadd.f32 %v740, %v1059
        %v1061 = vpop.f32.mrf.mxu0
        %1062 = vdwg.mxu0
        %v1063 = vmax.f32 %v905, 0.0
        %v1064 = vmax.f32 %v910, 0.0
        %v1065 = vmax.f32 %v915, 0.0
        %v1066 = vmax.f32 %v920, 0.0
        %v1067 = vmax.f32 %v925, 0.0
        %v1068 = vmax.f32 %v930, 0.0
        %v1069 = vmax.f32 %v935, 0.0
        %v1070 = vmax.f32 %v940, 0.0
        %v1071 = vmax.f32 %v945, 0.0
        %v1072 = vmax.f32 %v950, 0.0
        %v1073 = vmax.f32 %v955, 0.0
        %v1074 = vmax.f32 %v960, 0.0
        %v1075 = vmax.f32 %v965, 0.0
        %v1076 = vmax.f32 %v970, 0.0
        %v1077 = vmax.f32 %v975, 0.0
        %v1078 = vmax.f32 %v980, 0.0
        %v1079 = vmax.f32 %v985, 0.0
        %v1080 = vmax.f32 %v990, 0.0
        %v1081 = vmax.f32 %v995, 0.0
        %v1082 = vmax.f32 %v1000, 0.0
        %v1083 = vmax.f32 %v1005, 0.0
        %v1084 = vmax.f32 %v1010, 0.0
        %v1085 = vmax.f32 %v1015, 0.0
        %v1086 = vmax.f32 %v1020, 0.0
        %v1087 = vmax.f32 %v1025, 0.0
        %v1088 = vmax.f32 %v1030, 0.0
        %v1089 = vmax.f32 %v1035, 0.0
        %v1090 = vmax.f32 %v1040, 0.0
        %v1091 = vmax.f32 %v1045, 0.0
        %v1092 = vmax.f32 %v1050, 0.0
        %v1093 = vmax.f32 %v1055, 0.0
        %v1094 = vmax.f32 %v1060, 0.0
        %v1095 = vld [vmem:[%s3] sm:$0xff]
        %v1096 = vld [vmem:[%s3 + $0x8] sm:$0xff]
        %v1097 = vld [vmem:[%s3 + $0x10] sm:$0xff]
        %v1098 = vld [vmem:[%s3 + $0x18] sm:$0xff]
        %v1099 = vld [vmem:[%s3 + $0x20] sm:$0xff]
        %v1100 = vld [vmem:[%s3 + $0x28] sm:$0xff]
        %v1101 = vld [vmem:[%s3 + $0x30] sm:$0xff]
        %v1102 = vld [vmem:[%s3 + $0x38] sm:$0xff]
        %v1103 = vld [vmem:[%s3 + $0x40] sm:$0xff]
        %v1104 = vld [vmem:[%s3 + $0x48] sm:$0xff]
        %v1105 = vld [vmem:[%s3 + $0x50] sm:$0xff]
        %v1106 = vld [vmem:[%s3 + $0x58] sm:$0xff]
        %v1107 = vld [vmem:[%s3 + $0x60] sm:$0xff]
        %v1108 = vld [vmem:[%s3 + $0x68] sm:$0xff]
        %v1109 = vld [vmem:[%s3 + $0x70] sm:$0xff]
        %v1110 = vld [vmem:[%s3 + $0x78] sm:$0xff]
        %v1111 = vld [vmem:[%s4] sm:$0x1]
        %v1113 = vlaneseq
        %v1114 = vshrl.u32 %v1113, 7
        %v1115 = vsub.s32 0, %v1114
        %v1116 = vrot.slane %v1111, %v1115
        %1118 = vmatprep.subr.mxu0 0.0
        %1119 = vmatpush1.msra.mxu0 %v1110
        %1120 = vmatprep.subr.mxu0 0.0
        %1121 = vmatpush1.msra.mxu0 %v1109
        %1122 = vmatprep.subr.mxu0 0.0
        %1123 = vmatpush1.msra.mxu0 %v1108
        %1124 = vmatprep.subr.mxu0 0.0
        %1125 = vmatpush1.msra.mxu0 %v1107
        %1126 = vmatprep.subr.mxu0 0.0
        %1127 = vmatpush1.msra.mxu0 %v1106
        %1128 = vmatprep.subr.mxu0 0.0
        %1129 = vmatpush1.msra.mxu0 %v1105
        %1130 = vmatprep.subr.mxu0 0.0
        %1131 = vmatpush1.msra.mxu0 %v1104
        %1132 = vmatprep.subr.mxu0 0.0
        %1133 = vmatpush1.msra.mxu0 %v1103
        %1134 = vmatprep.subr.mxu0 0.0
        %1135 = vmatpush1.msra.mxu0 %v1102
        %1136 = vmatprep.subr.mxu0 0.0
        %1137 = vmatpush1.msra.mxu0 %v1101
        %1138 = vmatprep.subr.mxu0 0.0
        %1139 = vmatpush1.msra.mxu0 %v1100
        %1140 = vmatprep.subr.mxu0 0.0
        %1141 = vmatpush1.msra.mxu0 %v1099
        %1142 = vmatprep.subr.mxu0 0.0
        %1143 = vmatpush1.msra.mxu0 %v1098
        %1144 = vmatprep.subr.mxu0 0.0
        %1145 = vmatpush1.msra.mxu0 %v1097
        %1146 = vmatprep.subr.mxu0 0.0
        %1147 = vmatpush1.msra.mxu0 %v1096
        %1148 = vmatprep.subr.mxu0 0.0
        %1149 = vmatpush1.msra.mxu0 %v1095
        %1150 = vmatprep.subr.mxu0 0.0
        %1151 = vmatpush2.msra.mxu0 0.0
        %1152 = vmatprep.subr.mxu0 0.0
        %1153 = vmatpush2.msra.mxu0 0.0
        %1154 = vmatprep.subr.mxu0 0.0
        %1155 = vmatpush2.msra.mxu0 0.0
        %1156 = vmatprep.subr.mxu0 0.0
        %1157 = vmatpush2.msra.mxu0 0.0
        %1158 = vmatprep.subr.mxu0 0.0
        %1159 = vmatpush2.msra.mxu0 0.0
        %1160 = vmatprep.subr.mxu0 0.0
        %1161 = vmatpush2.msra.mxu0 0.0
        %1162 = vmatprep.subr.mxu0 0.0
        %1163 = vmatpush2.msra.mxu0 0.0
        %1164 = vmatprep.subr.mxu0 0.0
        %1165 = vmatpush2.msra.mxu0 0.0
        %1166 = vmatprep.subr.mxu0 0.0
        %1167 = vmatpush2.msra.mxu0 0.0
        %1168 = vmatprep.subr.mxu0 0.0
        %1169 = vmatpush2.msra.mxu0 0.0
        %1170 = vmatprep.subr.mxu0 0.0
        %1171 = vmatpush2.msra.mxu0 0.0
        %1172 = vmatprep.subr.mxu0 0.0
        %1173 = vmatpush2.msra.mxu0 0.0
        %1174 = vmatprep.subr.mxu0 0.0
        %1175 = vmatpush2.msra.mxu0 0.0
        %1176 = vmatprep.subr.mxu0 0.0
        %1177 = vmatpush2.msra.mxu0 0.0
        %1178 = vmatprep.subr.mxu0 0.0
        %1179 = vmatpush2.msra.mxu0 0.0
        %1180 = vmatprep.subr.mxu0 0.0
        %1181 = vmatpush2.msra.mxu0 0.0
        %1182 = vmatprep.mubr.f32.mxu0 0.0
        %1183 = vmatmul.mubr.f32.gmra.mxu0 %v1063
        %v1184 = vpop.f32.mrf.mxu0
        %v1185 = vadd.f32 %v1116, %v1184
        %v1186 = vpop.f32.mrf.mxu0
        %1187 = vmatprep.mubr.f32.mxu0 0.0
        %1188 = vmatmul.mubr.f32.gmra.mxu0 %v1064
        %v1189 = vpop.f32.mrf.mxu0
        %v1190 = vadd.f32 %v1116, %v1189
        %v1191 = vpop.f32.mrf.mxu0
        %1192 = vmatprep.mubr.f32.mxu0 0.0
        %1193 = vmatmul.mubr.f32.gmra.mxu0 %v1065
        %v1194 = vpop.f32.mrf.mxu0
        %v1195 = vadd.f32 %v1116, %v1194
        %v1196 = vpop.f32.mrf.mxu0
        %1197 = vmatprep.mubr.f32.mxu0 0.0
        %1198 = vmatmul.mubr.f32.gmra.mxu0 %v1066
        %v1199 = vpop.f32.mrf.mxu0
        %v1200 = vadd.f32 %v1116, %v1199
        %v1201 = vpop.f32.mrf.mxu0
        %1202 = vmatprep.mubr.f32.mxu0 0.0
        %1203 = vmatmul.mubr.f32.gmra.mxu0 %v1067
        %v1204 = vpop.f32.mrf.mxu0
        %v1205 = vadd.f32 %v1116, %v1204
        %v1206 = vpop.f32.mrf.mxu0
        %1207 = vmatprep.mubr.f32.mxu0 0.0
        %1208 = vmatmul.mubr.f32.gmra.mxu0 %v1068
        %v1209 = vpop.f32.mrf.mxu0
        %v1210 = vadd.f32 %v1116, %v1209
        %v1211 = vpop.f32.mrf.mxu0
        %1212 = vmatprep.mubr.f32.mxu0 0.0
        %1213 = vmatmul.mubr.f32.gmra.mxu0 %v1069
        %v1214 = vpop.f32.mrf.mxu0
        %v1215 = vadd.f32 %v1116, %v1214
        %v1216 = vpop.f32.mrf.mxu0
        %1217 = vmatprep.mubr.f32.mxu0 0.0
        %1218 = vmatmul.mubr.f32.gmra.mxu0 %v1070
        %v1219 = vpop.f32.mrf.mxu0
        %v1220 = vadd.f32 %v1116, %v1219
        %v1221 = vpop.f32.mrf.mxu0
        %1222 = vmatprep.mubr.f32.mxu0 0.0
        %1223 = vmatmul.mubr.f32.gmra.mxu0 %v1071
        %v1224 = vpop.f32.mrf.mxu0
        %v1225 = vadd.f32 %v1116, %v1224
        %v1226 = vpop.f32.mrf.mxu0
        %1227 = vmatprep.mubr.f32.mxu0 0.0
        %1228 = vmatmul.mubr.f32.gmra.mxu0 %v1072
        %v1229 = vpop.f32.mrf.mxu0
        %v1230 = vadd.f32 %v1116, %v1229
        %v1231 = vpop.f32.mrf.mxu0
        %1232 = vmatprep.mubr.f32.mxu0 0.0
        %1233 = vmatmul.mubr.f32.gmra.mxu0 %v1073
        %v1234 = vpop.f32.mrf.mxu0
        %v1235 = vadd.f32 %v1116, %v1234
        %v1236 = vpop.f32.mrf.mxu0
        %1237 = vmatprep.mubr.f32.mxu0 0.0
        %1238 = vmatmul.mubr.f32.gmra.mxu0 %v1074
        %v1239 = vpop.f32.mrf.mxu0
        %v1240 = vadd.f32 %v1116, %v1239
        %v1241 = vpop.f32.mrf.mxu0
        %1242 = vmatprep.mubr.f32.mxu0 0.0
        %1243 = vmatmul.mubr.f32.gmra.mxu0 %v1075
        %v1244 = vpop.f32.mrf.mxu0
        %v1245 = vadd.f32 %v1116, %v1244
        %v1246 = vpop.f32.mrf.mxu0
        %1247 = vmatprep.mubr.f32.mxu0 0.0
        %1248 = vmatmul.mubr.f32.gmra.mxu0 %v1076
        %v1249 = vpop.f32.mrf.mxu0
        %v1250 = vadd.f32 %v1116, %v1249
        %v1251 = vpop.f32.mrf.mxu0
        %1252 = vmatprep.mubr.f32.mxu0 0.0
        %1253 = vmatmul.mubr.f32.gmra.mxu0 %v1077
        %v1254 = vpop.f32.mrf.mxu0
        %v1255 = vadd.f32 %v1116, %v1254
        %v1256 = vpop.f32.mrf.mxu0
        %1257 = vmatprep.mubr.f32.mxu0 0.0
        %1258 = vmatmul.mubr.f32.gmra.mxu0 %v1078
        %v1259 = vpop.f32.mrf.mxu0
        %v1260 = vadd.f32 %v1116, %v1259
        %v1261 = vpop.f32.mrf.mxu0
        %1262 = vmatprep.mubr.f32.mxu0 0.0
        %1263 = vmatmul.mubr.f32.gmra.mxu0 %v1079
        %v1264 = vpop.f32.mrf.mxu0
        %v1265 = vadd.f32 %v1116, %v1264
        %v1266 = vpop.f32.mrf.mxu0
        %1267 = vmatprep.mubr.f32.mxu0 0.0
        %1268 = vmatmul.mubr.f32.gmra.mxu0 %v1080
        %v1269 = vpop.f32.mrf.mxu0
        %v1270 = vadd.f32 %v1116, %v1269
        %v1271 = vpop.f32.mrf.mxu0
        %1272 = vmatprep.mubr.f32.mxu0 0.0
        %1273 = vmatmul.mubr.f32.gmra.mxu0 %v1081
        %v1274 = vpop.f32.mrf.mxu0
        %v1275 = vadd.f32 %v1116, %v1274
        %v1276 = vpop.f32.mrf.mxu0
        %1277 = vmatprep.mubr.f32.mxu0 0.0
        %1278 = vmatmul.mubr.f32.gmra.mxu0 %v1082
        %v1279 = vpop.f32.mrf.mxu0
        %v1280 = vadd.f32 %v1116, %v1279
        %v1281 = vpop.f32.mrf.mxu0
        %1282 = vmatprep.mubr.f32.mxu0 0.0
        %1283 = vmatmul.mubr.f32.gmra.mxu0 %v1083
        %v1284 = vpop.f32.mrf.mxu0
        %v1285 = vadd.f32 %v1116, %v1284
        %v1286 = vpop.f32.mrf.mxu0
        %1287 = vmatprep.mubr.f32.mxu0 0.0
        %1288 = vmatmul.mubr.f32.gmra.mxu0 %v1084
        %v1289 = vpop.f32.mrf.mxu0
        %v1290 = vadd.f32 %v1116, %v1289
        %v1291 = vpop.f32.mrf.mxu0
        %1292 = vmatprep.mubr.f32.mxu0 0.0
        %1293 = vmatmul.mubr.f32.gmra.mxu0 %v1085
        %v1294 = vpop.f32.mrf.mxu0
        %v1295 = vadd.f32 %v1116, %v1294
        %v1296 = vpop.f32.mrf.mxu0
        %1297 = vmatprep.mubr.f32.mxu0 0.0
        %1298 = vmatmul.mubr.f32.gmra.mxu0 %v1086
        %v1299 = vpop.f32.mrf.mxu0
        %v1300 = vadd.f32 %v1116, %v1299
        %v1301 = vpop.f32.mrf.mxu0
        %1302 = vmatprep.mubr.f32.mxu0 0.0
        %1303 = vmatmul.mubr.f32.gmra.mxu0 %v1087
        %v1304 = vpop.f32.mrf.mxu0
        %v1305 = vadd.f32 %v1116, %v1304
        %v1306 = vpop.f32.mrf.mxu0
        %1307 = vmatprep.mubr.f32.mxu0 0.0
        %1308 = vmatmul.mubr.f32.gmra.mxu0 %v1088
        %v1309 = vpop.f32.mrf.mxu0
        %v1310 = vadd.f32 %v1116, %v1309
        %v1311 = vpop.f32.mrf.mxu0
        %1312 = vmatprep.mubr.f32.mxu0 0.0
        %1313 = vmatmul.mubr.f32.gmra.mxu0 %v1089
        %v1314 = vpop.f32.mrf.mxu0
        %v1315 = vadd.f32 %v1116, %v1314
        %v1316 = vpop.f32.mrf.mxu0
        %1317 = vmatprep.mubr.f32.mxu0 0.0
        %1318 = vmatmul.mubr.f32.gmra.mxu0 %v1090
        %v1319 = vpop.f32.mrf.mxu0
        %v1320 = vadd.f32 %v1116, %v1319
        %v1321 = vpop.f32.mrf.mxu0
        %1322 = vmatprep.mubr.f32.mxu0 0.0
        %1323 = vmatmul.mubr.f32.gmra.mxu0 %v1091
        %v1324 = vpop.f32.mrf.mxu0
        %v1325 = vadd.f32 %v1116, %v1324
        %v1326 = vpop.f32.mrf.mxu0
        %1327 = vmatprep.mubr.f32.mxu0 0.0
        %1328 = vmatmul.mubr.f32.gmra.mxu0 %v1092
        %v1329 = vpop.f32.mrf.mxu0
        %v1330 = vadd.f32 %v1116, %v1329
        %v1331 = vpop.f32.mrf.mxu0
        %1332 = vmatprep.mubr.f32.mxu0 0.0
        %1333 = vmatmul.mubr.f32.gmra.mxu0 %v1093
        %v1334 = vpop.f32.mrf.mxu0
        %v1335 = vadd.f32 %v1116, %v1334
        %v1336 = vpop.f32.mrf.mxu0
        %1337 = vmatprep.mubr.f32.mxu0 0.0
        %1338 = vmatmul.mubr.f32.gmra.mxu0 %v1094
        %v1339 = vpop.f32.mrf.mxu0
        %v1340 = vadd.f32 %v1116, %v1339
        %v1341 = vpop.f32.mrf.mxu0
        %1342 = vdwg.mxu0
        %v1343 = vmax.f32 %v1185, 0.0
        %v1344 = vmax.f32 %v1190, 0.0
        %v1345 = vmax.f32 %v1195, 0.0
        %v1346 = vmax.f32 %v1200, 0.0
        %v1347 = vmax.f32 %v1205, 0.0
        %v1348 = vmax.f32 %v1210, 0.0
        %v1349 = vmax.f32 %v1215, 0.0
        %v1350 = vmax.f32 %v1220, 0.0
        %v1351 = vmax.f32 %v1225, 0.0
        %v1352 = vmax.f32 %v1230, 0.0
        %v1353 = vmax.f32 %v1235, 0.0
        %v1354 = vmax.f32 %v1240, 0.0
        %v1355 = vmax.f32 %v1245, 0.0
        %v1356 = vmax.f32 %v1250, 0.0
        %v1357 = vmax.f32 %v1255, 0.0
        %v1358 = vmax.f32 %v1260, 0.0
        %v1359 = vmax.f32 %v1265, 0.0
        %v1360 = vmax.f32 %v1270, 0.0
        %v1361 = vmax.f32 %v1275, 0.0
        %v1362 = vmax.f32 %v1280, 0.0
        %v1363 = vmax.f32 %v1285, 0.0
        %v1364 = vmax.f32 %v1290, 0.0
        %v1365 = vmax.f32 %v1295, 0.0
        %v1366 = vmax.f32 %v1300, 0.0
        %v1367 = vmax.f32 %v1305, 0.0
        %v1368 = vmax.f32 %v1310, 0.0
        %v1369 = vmax.f32 %v1315, 0.0
        %v1370 = vmax.f32 %v1320, 0.0
        %v1371 = vmax.f32 %v1325, 0.0
        %v1372 = vmax.f32 %v1330, 0.0
        %v1373 = vmax.f32 %v1335, 0.0
        %v1374 = vmax.f32 %v1340, 0.0
        %v1375 = vld [vmem:[%s5] sm:$0xff]
        %1376 = vmatprep.subr.mxu0 0.0
        %1377 = vmatpush1.xpose.msra.mxu0 %v1358
        %1378 = vmatprep.subr.mxu0 0.0
        %1379 = vmatpush1.xpose.msra.mxu0 %v1357
        %1380 = vmatprep.subr.mxu0 0.0
        %1381 = vmatpush1.xpose.msra.mxu0 %v1356
        %1382 = vmatprep.subr.mxu0 0.0
        %1383 = vmatpush1.xpose.msra.mxu0 %v1355
        %1384 = vmatprep.subr.mxu0 0.0
        %1385 = vmatpush1.xpose.msra.mxu0 %v1354
        %1386 = vmatprep.subr.mxu0 0.0
        %1387 = vmatpush1.xpose.msra.mxu0 %v1353
        %1388 = vmatprep.subr.mxu0 0.0
        %1389 = vmatpush1.xpose.msra.mxu0 %v1352
        %1390 = vmatprep.subr.mxu0 0.0
        %1391 = vmatpush1.xpose.msra.mxu0 %v1351
        %1392 = vmatprep.subr.mxu0 0.0
        %1393 = vmatpush1.xpose.msra.mxu0 %v1350
        %1394 = vmatprep.subr.mxu0 0.0
        %1395 = vmatpush1.xpose.msra.mxu0 %v1349
        %1396 = vmatprep.subr.mxu0 0.0
        %1397 = vmatpush1.xpose.msra.mxu0 %v1348
        %1398 = vmatprep.subr.mxu0 0.0
        %1399 = vmatpush1.xpose.msra.mxu0 %v1347
        %1400 = vmatprep.subr.mxu0 0.0
        %1401 = vmatpush1.xpose.msra.mxu0 %v1346
        %1402 = vmatprep.subr.mxu0 0.0
        %1403 = vmatpush1.xpose.msra.mxu0 %v1345
        %1404 = vmatprep.subr.mxu0 0.0
        %1405 = vmatpush1.xpose.msra.mxu0 %v1344
        %1406 = vmatprep.subr.mxu0 0.0
        %1407 = vmatpush1.xpose.msra.mxu0 %v1343
        %1408 = vmatprep.subr.mxu0 0.0
        %1409 = vmatpush2.xpose.msra.mxu0 %v1374
        %1410 = vmatprep.subr.mxu0 0.0
        %1411 = vmatpush2.xpose.msra.mxu0 %v1373
        %1412 = vmatprep.subr.mxu0 0.0
        %1413 = vmatpush2.xpose.msra.mxu0 %v1372
        %1414 = vmatprep.subr.mxu0 0.0
        %1415 = vmatpush2.xpose.msra.mxu0 %v1371
        %1416 = vmatprep.subr.mxu0 0.0
        %1417 = vmatpush2.xpose.msra.mxu0 %v1370
        %1418 = vmatprep.subr.mxu0 0.0
        %1419 = vmatpush2.xpose.msra.mxu0 %v1369
        %1420 = vmatprep.subr.mxu0 0.0
        %1421 = vmatpush2.xpose.msra.mxu0 %v1368
        %1422 = vmatprep.subr.mxu0 0.0
        %1423 = vmatpush2.xpose.msra.mxu0 %v1367
        %1424 = vmatprep.subr.mxu0 0.0
        %1425 = vmatpush2.xpose.msra.mxu0 %v1366
        %1426 = vmatprep.subr.mxu0 0.0
        %1427 = vmatpush2.xpose.msra.mxu0 %v1365
        %1428 = vmatprep.subr.mxu0 0.0
        %1429 = vmatpush2.xpose.msra.mxu0 %v1364
        %1430 = vmatprep.subr.mxu0 0.0
        %1431 = vmatpush2.xpose.msra.mxu0 %v1363
        %1432 = vmatprep.subr.mxu0 0.0
        %1433 = vmatpush2.xpose.msra.mxu0 %v1362
        %1434 = vmatprep.subr.mxu0 0.0
        %1435 = vmatpush2.xpose.msra.mxu0 %v1361
        %1436 = vmatprep.subr.mxu0 0.0
        %1437 = vmatpush2.xpose.msra.mxu0 %v1360
        %1438 = vmatprep.subr.mxu0 0.0
        %1439 = vmatpush2.xpose.msra.mxu0 %v1359
        %1440 = vmatprep.mubr.f32.mxu0 0.0
        %1441 = vmatmul.mubr.f32.gmra.mxu0 %v1375
        %v1442 = vpop.f32.mrf.mxu0
        %v1443 = vadd.f32 0.0, %v1442
        %v1444 = vpop.f32.mrf.mxu0
        %v1445 = vadd.f32 0.0, %v1444
        %1446 = vdwg.mxu0
        %s1447 = sld [smem:[#allocation2]]
        %v1448 = vstv %s1447
        %v1449 = vadd.f32 %v1443, %v1448
        %v1450 = vadd.f32 %v1445, %v1448
        %v1453 = vcombine.low %v1449, %v1450
        %v1455 = vunpack.c.l.s4 1966171168
        %v1456 = vunpack.c.0.s8 %v1455
        %v1457 = vlaneseq
        %v1458 = vshrl.u32 %v1457, 7
        %v1459 = vsub.s32 %v1456, %v1458
        %v1460 = vrot.slane %v1453, %v1459
        %v1462 = vunpack.c.l.s4 1966171168
        %v1463 = vunpack.c.0.s8 %v1462
        %v1464 = vlaneseq
        %v1465 = vshrl.u32 %v1464, 7
        %v1466 = vsub.s32 %v1463, %v1465
        %v1467 = vrot.slane %v1460, %v1466
        %v1469 = vlaneseq
        %vm1470 = vcmp.ge.s32.totalorder %v1469, 0
        %vm1471 = vcmp.lt.s32.totalorder %v1469, 256
        %vm1472 = vmand %vm1470, %vm1471
        %1473 = vst.msk [vmem:[%s273] sm:$0x3] %vm1472, %v1467
        %s1474 = sand.u32 %s182, 1
        %s1475 = scalar_lea.sflag [#allocation4], %s1474
        %s1476 = sand.u32 %s182, 1
        %s1477 = smul.addr %s1476, 2
        %s1478 = scalar_lea.vmem [#allocation3], %s1477
        // Predicated region
        $region49: #{tpu_custom_call.1} parent=47 // pred_check
          %p1479 = pneg %p192
        $region50: #{tpu_custom_call.1} parent=47 // pred_check_branch
          %1481 = sbr.rel (%p1479) target = $region52
        $region51: #{tpu_custom_call.1} parent=47 // pred_region
          %s1482 = smul.u32 2, %s22
          %s1484 = ssub.s32 32, 32
          %1485 = vsyncadd %s1475, %s1484
          %s1486 = smul.addr %s1482, 16
          %s1487 = scalar_lea.hbm %s7, %s1486
          %s1489 = sshll.u32 %s1478, 4
          %s1490 = int_to_ptr.vmem [resolvable:$true] %s1489
          %1492 = dma.vmem_to_hbm [thread:$0]  %s1490, 32, %s1487, %s1475
        $region52: #{tpu_custom_call.1} parent=47 // pred_fallthru
          _
      $region48: #{tpu_custom_call.1} parent=5 // pred_fallthru
        _
      %p1493 = scmp.le.s32.totalorder 2, %s17
      // Predicated region
      $region53: #{tpu_custom_call.1} parent=5 // pred_check
        %p1494 = pneg %p1493
      $region54: #{tpu_custom_call.1} parent=5 // pred_check_branch
        %1496 = sbr.rel (%p1494) target = $region56
      $region55: #{tpu_custom_call.1} parent=5 // pred_region
        %s1497 = ssub.s32 %s17, 2
        // Predicated region
        $region57: #{tpu_custom_call.1} parent=55 // pred_check
          %p1498 = pneg %p198
        $region58: #{tpu_custom_call.1} parent=55 // pred_check_branch
          %1500 = sbr.rel (%p1498) target = $region60
        $region59: #{tpu_custom_call.1} parent=55 // pred_region
          %s1501 = sand.u32 %s183, 1
          %s1502 = scalar_lea.sflag [#allocation4], %s1501
          %s1503 = sand.u32 %s183, 1
          %s1504 = smul.addr %s1503, 2
          %s1505 = scalar_lea.vmem [#allocation3], %s1504
          %1506 = dma.done %s1502, 32
        $region60: #{tpu_custom_call.1} parent=55 // pred_fallthru
          _
      $region56: #{tpu_custom_call.1} parent=5 // pred_fallthru
        _
    $region6: #{tpu_custom_call.1} parent=1 // loop_footer
      %s21 = sadd.s32 1, %s17
    $region7: #{tpu_custom_call.1} parent=1 // loop_footer_branch
      %16 = sbr.rel target = $region3
    $region8: #{tpu_custom_call.1} parent=1 // loop_exit
      _
    %1507 = vsyncpa [#allocation4], 1
    %s1508 = scalar_lea.sflag [#allocation4], 1
    %1509 = vsyncpa %s1508, 1

</llo_original>
